<compile_context>
chip_gen: v7x
topology: tpu7x:2x2x1
jax: 0.10.0
libtpu: 0.0.40
codegen_flags: <defaults>
</compile_context>

<pallas_src>
import functools

import jax
import jax.numpy as jnp
from jax import lax
from jax.experimental import pallas as pl
from jax.experimental.pallas import tpu as pltpu

HIDDEN = 64
LANE = 128                              # TPU lane width
_VMEM_BUDGET = 16 * 1024 * 1024         # conservative across v5e/v6e/v7x scoped defaults


def _round_up(x, m):
    return (x + m - 1) // m * m


def _make_kernel(use_bf16_matmul):
    mm_dtype = jnp.bfloat16 if use_bf16_matmul else jnp.float32
    precision = (jax.lax.Precision.DEFAULT if use_bf16_matmul
                 else jax.lax.Precision.HIGHEST)

    def kernel(s_ref, w1_ref, b1_ref, w2_ref, b2_ref, w3_ref, b3_ref, o_ref):
        """One batch tile of the critic MLP; batch rides the lane axis.

        s_ref : (Bt, state_dim)  natural-layout input tile
        w1_ref: (64, state_dim)  b1_ref: (64, 1)
        w2_ref: (64, 64)         b2_ref: (64, 1)
        w3_ref: (64, 1)          b3_ref: (1, 1) scalar in SMEM
        o_ref : (1, Bt)          lane-dense output tile
        """
        # Layer 1: contract over state_dim of BOTH operands (A @ B^T form), so the
        # batch dim lands on the lane axis with no wrapper-side transpose.
        h1 = lax.dot_general(
            w1_ref[...], s_ref[...].astype(mm_dtype),
            dimension_numbers=(((1,), (1,)), ((), ())),
            preferred_element_type=jnp.float32,
            precision=precision,
        )                                                   # (64, Bt) f32
        h1 = jnp.maximum(h1 + b1_ref[...], 0.0)             # f32 VPU

        # Layer 2: Linear(64 -> 64) + ReLU.
        h2 = jnp.dot(
            w2_ref[...], h1.astype(mm_dtype),
            preferred_element_type=jnp.float32,
            precision=precision,
        )                                                   # (64, Bt) f32
        h2 = jnp.maximum(h2 + b2_ref[...], 0.0)

        # Layer 3: Linear(64 -> 1) as VPU multiply + sublane reduce (keeps the MXU
        # out of a 1-wide product and the result/store path lane-dense).
        v = jnp.sum(h2 * w3_ref[...], axis=0, keepdims=True) + b3_ref[0, 0]
        o_ref[...] = v.astype(o_ref.dtype)

    return kernel


def _choose_batch_tile(batch, state_dim):
    """Tile big enough to amortize ~0.35us/grid-step, small enough for VMEM,
    and >= 2 tiles for large batches (v7x megacore sharding)."""
    if batch <= 1024:
        return batch                       # single tile / single grid step
    # double-buffered streamed s tile + materialized (64, Bt) f32 intermediates
    bytes_per_row = 2 * state_dim * 4 + 2 * HIDDEN * 4
    cap = max(LANE, (_VMEM_BUDGET // bytes_per_row) // LANE * LANE)
    cap = min(cap, 8192)
    # at least two lane-aligned tiles so both v7x TensorCores get work
    return min(cap, _round_up(pl.cdiv(batch, 2), LANE))


@functools.partial(jax.jit, static_argnames=("batch_tile", "use_bf16_matmul"))
def critic_forward(s, params, *, batch_tile=None, use_bf16_matmul=False):
    """Critic MLP forward with a Pallas TPU kernel.

    s: (batch, state_dim) float32
    params: dict with w1 (state_dim,64), b1 (1,64), w2 (64,64), b2 (1,64),
            w3 (64,1), b3 (1,1)
    returns: (batch, 1) float32
    """
    batch, state_dim = s.shape
    if batch_tile is None:
        batch_tile = _choose_batch_tile(batch, state_dim)
    if batch_tile != batch:
        # lane-aligned tiles keep the output stores unmasked except the ragged tail
        assert batch_tile % LANE == 0, "batch_tile must be a multiple of 128"
    num_tiles = pl.cdiv(batch, batch_tile)

    # --- tiny, weight-only layout prep (no pass over the streamed input) -----
    mm_dtype = jnp.bfloat16 if use_bf16_matmul else jnp.float32
    w1_t = params["w1"].T.astype(mm_dtype)               # (64, state_dim)
    b1_c = params["b1"].reshape(HIDDEN, 1).astype(jnp.float32)
    w2_t = params["w2"].T.astype(mm_dtype)               # (64, 64)
    b2_c = params["b2"].reshape(HIDDEN, 1).astype(jnp.float32)
    w3_c = params["w3"].reshape(HIDDEN, 1).astype(jnp.float32)
    b3_s = params["b3"].reshape(1, 1).astype(jnp.float32)  # scalar -> SMEM

    def const_spec(shape):
        # Whole tensor every grid step; constant block index => DMA'd once, resident.
        return pl.BlockSpec(shape, lambda i: tuple(0 for _ in shape))

    out_t = pl.pallas_call(
        _make_kernel(use_bf16_matmul),
        out_shape=jax.ShapeDtypeStruct((1, batch), jnp.float32),
        grid=(num_tiles,),
        in_specs=[
            pl.BlockSpec((batch_tile, state_dim), lambda i: (i, 0)),  # streamed s
            const_spec(w1_t.shape),
            const_spec(b1_c.shape),
            const_spec(w2_t.shape),
            const_spec(b2_c.shape),
            const_spec(w3_c.shape),
            pl.BlockSpec(memory_space=pltpu.MemorySpace.SMEM),        # b3 scalar
        ],
        out_specs=pl.BlockSpec((1, batch_tile), lambda i: (0, i)),
        compiler_params=pltpu.CompilerParams(
            dimension_semantics=("parallel",),
            vmem_limit_bytes=32 * 1024 * 1024,
        ),
    )(s, w1_t, b1_c, w2_t, b2_c, w3_c, b3_s)

    # (1, batch) -> (batch, 1): logically a reshape (no transpose copy).
    return out_t.reshape(-1, 1)


def init_params(key, state_dim):
    """Deterministic init mimicking PyTorch nn.Linear default (U[-1/sqrt(fan_in), +])."""
    ks = jax.random.split(key, 6)

    def uniform(k, shape, fan_in):
        bound = 1.0 / jnp.sqrt(jnp.float32(fan_in))
        return jax.random.uniform(k, shape, jnp.float32, -bound, bound)

    return {
        "w1": uniform(ks[0], (state_dim, HIDDEN), state_dim),
        "b1": uniform(ks[1], (1, HIDDEN), state_dim),
        "w2": uniform(ks[2], (HIDDEN, HIDDEN), HIDDEN),
        "b2": uniform(ks[3], (1, HIDDEN), HIDDEN),
        "w3": uniform(ks[4], (HIDDEN, 1), HIDDEN),
        "b3": uniform(ks[5], (1, 1), HIDDEN),
    }


def critic_ref(s, params):
    """Pure-JAX reference (full f32 matmuls) for correctness checking."""
    p = jax.lax.Precision.HIGHEST
    h1 = jnp.maximum(jnp.dot(s, params["w1"], precision=p) + params["b1"], 0.0)
    h2 = jnp.maximum(jnp.dot(h1, params["w2"], precision=p) + params["b2"], 0.0)
    return jnp.dot(h2, params["w3"], precision=p) + params["b3"]


if __name__ == "__main__":
    key = jax.random.PRNGKey(0)
    k_param, k_input = jax.random.split(key)

    batch, state_dim = 8, 16
    params = init_params(k_param, state_dim)
    s = jax.random.normal(k_input, (batch, state_dim), jnp.float32)

    out = jax.block_until_ready(critic_forward(s, params))
    ref = critic_ref(s, params)
    assert out.shape == (batch, 1), out.shape
    assert jnp.allclose(out, ref, atol=1e-4, rtol=1e-4), (out, ref)

    # Ragged multi-tile path (batch % batch_tile != 0): the last tile's garbage
    # lanes are never mixed across the batch axis and the output write is masked.
    batch2 = 300
    s2 = jax.random.normal(jax.random.PRNGKey(1), (batch2, state_dim), jnp.float32)
    out2 = jax.block_until_ready(critic_forward(s2, params, batch_tile=128))
    ref2 = critic_ref(s2, params)
    assert out2.shape == (batch2, 1), out2.shape
    assert jnp.allclose(out2, ref2, atol=1e-4, rtol=1e-4), (out2, ref2)

    print("KERNEL_OK")
</pallas_src>

<mosaic_0001>
module attributes {stable_mosaic.version = 11 : i64} {
  func.func @kernel(%arg0: i32, %arg1: memref<8x16xf32, #tpu.memory_space<vmem>>, %arg2: memref<64x16xf32, #tpu.memory_space<vmem>>, %arg3: memref<64x1xf32, #tpu.memory_space<vmem>>, %arg4: memref<64x64xf32, #tpu.memory_space<vmem>>, %arg5: memref<64x1xf32, #tpu.memory_space<vmem>>, %arg6: memref<64x1xf32, #tpu.memory_space<vmem>>, %arg7: memref<1x1xf32, #tpu.memory_space<smem>>, %arg8: memref<1x8xf32, #tpu.memory_space<vmem>>) attributes {dimension_semantics = [#tpu.dimension_semantics<parallel>], iteration_bounds = array<i64: 1>, scalar_prefetch = 0 : i64, scratch_operands = 0 : i64, tpu.core_type = #tpu.core_type<tc>, window_params = [{transform_indices = @transform_0, window_bounds = array<i64: 8, 16>}, {pipeline_mode = #tpu.pipeline_mode<synchronous>, transform_indices = @transform_1, window_bounds = array<i64: 64, 16>}, {pipeline_mode = #tpu.pipeline_mode<synchronous>, transform_indices = @transform_2, window_bounds = array<i64: 64, 1>}, {pipeline_mode = #tpu.pipeline_mode<synchronous>, transform_indices = @transform_3, window_bounds = array<i64: 64, 64>}, {pipeline_mode = #tpu.pipeline_mode<synchronous>, transform_indices = @transform_4, window_bounds = array<i64: 64, 1>}, {pipeline_mode = #tpu.pipeline_mode<synchronous>, transform_indices = @transform_5, window_bounds = array<i64: 64, 1>}, {transform_indices = @transform_6, window_bounds = array<i64: 1, 1>}, {transform_indices = @transform_7, window_bounds = array<i64: 1, 8>}]} {
    %c0 = arith.constant 0 : index
    %c0_0 = arith.constant 0 : index
    %0 = vector.load %arg2[%c0, %c0_0] : memref<64x16xf32, #tpu.memory_space<vmem>>, vector<64x16xf32>
    %c0_1 = arith.constant 0 : index
    %c0_2 = arith.constant 0 : index
    %1 = vector.load %arg1[%c0_1, %c0_2] : memref<8x16xf32, #tpu.memory_space<vmem>>, vector<8x16xf32>
    %cst = arith.constant dense<0.000000e+00> : vector<64x8xf32>
    %2 = tpu.matmul %0, %1, %cst {dimension_numbers = #tpu.dot_dimension_numbers<[1], [1], [0], [0], [0, 0, 1, 0], [], []>, precision = #tpu.contract_precision<fp32>} : vector<64x16xf32>, vector<8x16xf32>, vector<64x8xf32> -> vector<64x8xf32>
    %c0_3 = arith.constant 0 : index
    %c0_4 = arith.constant 0 : index
    %3 = vector.load %arg3[%c0_3, %c0_4] : memref<64x1xf32, #tpu.memory_space<vmem>>, vector<64x1xf32>
    %4 = vector.broadcast %3 : vector<64x1xf32> to vector<64x8xf32>
    %5 = arith.addf %2, %4 : vector<64x8xf32>
    %cst_5 = arith.constant 0.000000e+00 : f32
    %6 = vector.broadcast %cst_5 : f32 to vector<64x8xf32>
    %7 = arith.maximumf %5, %6 : vector<64x8xf32>
    %c0_6 = arith.constant 0 : index
    %c0_7 = arith.constant 0 : index
    %8 = vector.load %arg4[%c0_6, %c0_7] : memref<64x64xf32, #tpu.memory_space<vmem>>, vector<64x64xf32>
    %cst_8 = arith.constant dense<0.000000e+00> : vector<64x8xf32>
    %9 = tpu.matmul %8, %7, %cst_8 {dimension_numbers = #tpu.dot_dimension_numbers<[1], [0], [0], [1], [0, 0, 1, 1], [], []>, precision = #tpu.contract_precision<fp32>} : vector<64x64xf32>, vector<64x8xf32>, vector<64x8xf32> -> vector<64x8xf32>
    %c0_9 = arith.constant 0 : index
    %c0_10 = arith.constant 0 : index
    %10 = vector.load %arg5[%c0_9, %c0_10] : memref<64x1xf32, #tpu.memory_space<vmem>>, vector<64x1xf32>
    %11 = vector.broadcast %10 : vector<64x1xf32> to vector<64x8xf32>
    %12 = arith.addf %9, %11 : vector<64x8xf32>
    %cst_11 = arith.constant 0.000000e+00 : f32
    %13 = vector.broadcast %cst_11 : f32 to vector<64x8xf32>
    %14 = arith.maximumf %12, %13 : vector<64x8xf32>
    %c0_12 = arith.constant 0 : index
    %c0_13 = arith.constant 0 : index
    %15 = vector.load %arg6[%c0_12, %c0_13] : memref<64x1xf32, #tpu.memory_space<vmem>>, vector<64x1xf32>
    %16 = vector.broadcast %15 : vector<64x1xf32> to vector<64x8xf32>
    %17 = arith.mulf %14, %16 : vector<64x8xf32>
    %cst_14 = arith.constant dense<0.000000e+00> : vector<8xf32>
    %18 = vector.multi_reduction <add>, %17, %cst_14 [0] : vector<64x8xf32> to vector<8xf32>
    %19 = vector.shape_cast %18 : vector<8xf32> to vector<1x8xf32>
    %c0_15 = arith.constant 0 : index
    %c0_16 = arith.constant 0 : index
    %20 = memref.load %arg7[%c0_15, %c0_16] : memref<1x1xf32, #tpu.memory_space<smem>>
    %21 = vector.broadcast %20 : f32 to vector<1x8xf32>
    %22 = arith.addf %19, %21 : vector<1x8xf32>
    %c0_17 = arith.constant 0 : index
    %c0_18 = arith.constant 0 : index
    %23 = vector.load %arg8[%c0_17, %c0_18] : memref<1x8xf32, #tpu.memory_space<vmem>>, vector<1x8xf32>
    tpu.vector_store %arg8[%c0_17, %c0_18], %22 {strides = array<i32>} : memref<1x8xf32, #tpu.memory_space<vmem>>, vector<1x8xf32>,
    return
  }
  func.func @transform_0(%arg0: i32) -> (i32, i32) {
    %c0_i32 = arith.constant 0 : i32
    %c0_i32_0 = arith.constant 0 : i32
    return %arg0, %c0_i32 : i32, i32
  }
  func.func @transform_1(%arg0: i32) -> (i32, i32) {
    %c0_i32 = arith.constant 0 : i32
    %c0_i32_0 = arith.constant 0 : i32
    %c0_i32_1 = arith.constant 0 : i32
    return %c0_i32, %c0_i32_0 : i32, i32
  }
  func.func @transform_2(%arg0: i32) -> (i32, i32) {
    %c0_i32 = arith.constant 0 : i32
    %c0_i32_0 = arith.constant 0 : i32
    %c0_i32_1 = arith.constant 0 : i32
    return %c0_i32, %c0_i32_0 : i32, i32
  }
  func.func @transform_3(%arg0: i32) -> (i32, i32) {
    %c0_i32 = arith.constant 0 : i32
    %c0_i32_0 = arith.constant 0 : i32
    %c0_i32_1 = arith.constant 0 : i32
    return %c0_i32, %c0_i32_0 : i32, i32
  }
  func.func @transform_4(%arg0: i32) -> (i32, i32) {
    %c0_i32 = arith.constant 0 : i32
    %c0_i32_0 = arith.constant 0 : i32
    %c0_i32_1 = arith.constant 0 : i32
    return %c0_i32, %c0_i32_0 : i32, i32
  }
  func.func @transform_5(%arg0: i32) -> (i32, i32) {
    %c0_i32 = arith.constant 0 : i32
    %c0_i32_0 = arith.constant 0 : i32
    %c0_i32_1 = arith.constant 0 : i32
    return %c0_i32, %c0_i32_0 : i32, i32
  }
  func.func @transform_6(%arg0: i32) -> (i32, i32) {
    %c0_i32 = arith.constant 0 : i32
    %c0_i32_0 = arith.constant 0 : i32
    %c0_i32_1 = arith.constant 0 : i32
    return %c0_i32, %c0_i32_0 : i32, i32
  }
  func.func @transform_7(%arg0: i32) -> (i32, i32) {
    %c0_i32 = arith.constant 0 : i32
    %c0_i32_0 = arith.constant 0 : i32
    return %c0_i32, %arg0 : i32, i32
  }
}

</mosaic_0001>

<llo_original>
// kernel: critic_forward.1
$region0: #{critic_forward.1}
  #allocation0 [shape = 'u32[]', space=smem, size = 0x4, offset = 0x4, fixed_abs, tag = 'smem constant byte address 0x4 - core index']
  #allocation1 [shape = 'u32[144,128]{1,0:T(1,128)}', space=vmem, size = 0x12000, scoped, tag = 'internal scratch']
  #allocation2 [shape = 'f32[1,1]{1,0:T(1,128)S(6)}', space=smem, size = 0x200, scoped, tag = 'scoped memory for critic_forward.1']
  %s0 = inlined_call_operand.vmem [shape: f32[8,16], index: 0, kind: input, shape index: {}]
  %s1 = inlined_call_operand.vmem [shape: f32[64,16], index: 1, kind: input, shape index: {}]
  %s2 = inlined_call_operand.vmem [shape: f32[64,1], index: 2, kind: input, shape index: {}]
  %s3 = inlined_call_operand.vmem [shape: f32[64,64], index: 3, kind: input, shape index: {}]
  %s4 = inlined_call_operand.vmem [shape: f32[64,1], index: 4, kind: input, shape index: {}]
  %s5 = inlined_call_operand.vmem [shape: f32[64,1], index: 5, kind: input, shape index: {}]
  %s6 = inlined_call_operand.<no memory space> [shape: f32[1,1], index: 6, kind: input, shape index: {}]
  %s7 = inlined_call_operand.hbm [shape: f32[1,8], index: 7, kind: output, shape index: {}]
  %s8 = sld [smem:[#allocation0]]
  $region38: #{critic_forward.1} parent=0
    _
  %s10 = ssub.s32 1, %s8
  %s11 = scalar_select 0, %s10, %s8
  %12 = sst [smem:[#allocation2]] %s6
  $region1: #{critic_forward.1} parent=0
    #allocation3 [shape = 'u8[512]{0}', space=vmem, size = 0x400, scoped, tag = 'output window, operand 0, single buffered']
    #allocation4 [shape = 's32[1]{0}', space=sflag, size = 0x4, scoped, tag = 'scoped memory for critic_forward.1']
    %13 = vsyncpa [#allocation4], 0
    // Predicated region
    $region2: #{critic_forward.1} parent=1 // pred_check
      _
    $region3: #{critic_forward.1} parent=1 // pred_check_branch
      %15 = sbr.rel (0) target = $region5
    $region4: #{critic_forward.1} parent=1 // pred_region
      _
    $region5: #{critic_forward.1} parent=1 // pred_fallthru
      _
    // Predicated region
    $region6: #{critic_forward.1} parent=1 // pred_check
      _
    $region7: #{critic_forward.1} parent=1 // pred_check_branch
      %17 = sbr.rel (0) target = $region9
    $region8: #{critic_forward.1} parent=1 // pred_region
      _
    $region9: #{critic_forward.1} parent=1 // pred_fallthru
      _
    // Predicated region
    $region10: #{critic_forward.1} parent=1 // pred_check
      _
    $region11: #{critic_forward.1} parent=1 // pred_check_branch
      %19 = sbr.rel (0) target = $region13
    $region12: #{critic_forward.1} parent=1 // pred_region
      _
    $region13: #{critic_forward.1} parent=1 // pred_fallthru
      _
    // Predicated region
    $region14: #{critic_forward.1} parent=1 // pred_check
      _
    $region15: #{critic_forward.1} parent=1 // pred_check_branch
      %21 = sbr.rel (0) target = $region17
    $region16: #{critic_forward.1} parent=1 // pred_region
      _
    $region17: #{critic_forward.1} parent=1 // pred_fallthru
      _
    // Predicated region
    $region18: #{critic_forward.1} parent=1 // pred_check
      _
    $region19: #{critic_forward.1} parent=1 // pred_check_branch
      %23 = sbr.rel (0) target = $region21
    $region20: #{critic_forward.1} parent=1 // pred_region
      _
    $region21: #{critic_forward.1} parent=1 // pred_fallthru
      _
    // Predicated region
    $region22: #{critic_forward.1} parent=1 // pred_check
      _
    $region23: #{critic_forward.1} parent=1 // pred_check_branch
      %25 = sbr.rel (0) target = $region25
    $region24: #{critic_forward.1} parent=1 // pred_region
      _
    $region25: #{critic_forward.1} parent=1 // pred_fallthru
      _
    // Predicated region
    $region26: #{critic_forward.1} parent=1 // pred_check
      _
    $region27: #{critic_forward.1} parent=1 // pred_check_branch
      %27 = sbr.rel (0) target = $region29
    $region28: #{critic_forward.1} parent=1 // pred_region
      _
    $region29: #{critic_forward.1} parent=1 // pred_fallthru
      _
    %v28 = vld [vmem:[%s1] sm:$0xff]
    %v29 = vld [vmem:[%s1 + $0x8] sm:$0xff]
    %v30 = vld [vmem:[%s1 + $0x10] sm:$0xff]
    %v31 = vld [vmem:[%s1 + $0x18] sm:$0xff]
    %v32 = vld [vmem:[%s1 + $0x20] sm:$0xff]
    %v33 = vld [vmem:[%s1 + $0x28] sm:$0xff]
    %v34 = vld [vmem:[%s1 + $0x30] sm:$0xff]
    %v35 = vld [vmem:[%s1 + $0x38] sm:$0xff]
    %v36 = vld [vmem:[%s0] sm:$0xff]
    %v37 = vld [vmem:[%s2] sm:$0xff]
    %v38 = vld [vmem:[%s2 + $0x8] sm:$0xff]
    %v39 = vld [vmem:[%s2 + $0x10] sm:$0xff]
    %v40 = vld [vmem:[%s2 + $0x18] sm:$0xff]
    %v41 = vld [vmem:[%s2 + $0x20] sm:$0xff]
    %v42 = vld [vmem:[%s2 + $0x28] sm:$0xff]
    %v43 = vld [vmem:[%s2 + $0x30] sm:$0xff]
    %v44 = vld [vmem:[%s2 + $0x38] sm:$0xff]
    %46 = vset.pattern.permute.xlu0 0
    %47 = vperm.xlu0 %46, %v37
    %v48 = vpop.permute.xlu0 %47
    %51 = vset.pattern.permute.xlu0 0
    %52 = vperm.xlu0 %51, %v38
    %v53 = vpop.permute.xlu0 %52
    %56 = vset.pattern.permute.xlu0 0
    %57 = vperm.xlu0 %56, %v39
    %v58 = vpop.permute.xlu0 %57
    %61 = vset.pattern.permute.xlu0 0
    %62 = vperm.xlu0 %61, %v40
    %v63 = vpop.permute.xlu0 %62
    %66 = vset.pattern.permute.xlu0 0
    %67 = vperm.xlu0 %66, %v41
    %v68 = vpop.permute.xlu0 %67
    %71 = vset.pattern.permute.xlu0 0
    %72 = vperm.xlu0 %71, %v42
    %v73 = vpop.permute.xlu0 %72
    %76 = vset.pattern.permute.xlu0 0
    %77 = vperm.xlu0 %76, %v43
    %v78 = vpop.permute.xlu0 %77
    %81 = vset.pattern.permute.xlu0 0
    %82 = vperm.xlu0 %81, %v44
    %v83 = vpop.permute.xlu0 %82
    %vm85 = vcmask 130048
    %v87 = vsel %vm85, %v28, 0
    %v90 = vsel %vm85, %v29, 0
    %v93 = vsel %vm85, %v30, 0
    %v96 = vsel %vm85, %v31, 0
    %v99 = vsel %vm85, %v32, 0
    %v102 = vsel %vm85, %v33, 0
    %v105 = vsel %vm85, %v34, 0
    %v108 = vsel %vm85, %v35, 0
    %v111 = vsel %vm85, %v36, 0
    %113 = vmatprep.subr.mxu0 0.0
    %v114 = vand.u32 %v111, 4294901760
    %115 = vmatpush1.xpose.msra.mxu0 %v114
    %116 = vmatprep.subr.mxu0 0.0
    %117 = vmatpush1.xpose.msra.mxu0 0.0
    %118 = vmatprep.subr.mxu0 0.0
    %119 = vmatpush1.xpose.msra.mxu0 0.0
    %120 = vmatprep.subr.mxu0 0.0
    %121 = vmatpush1.xpose.msra.mxu0 0.0
    %122 = vmatprep.subr.mxu0 0.0
    %123 = vmatpush1.xpose.msra.mxu0 0.0
    %124 = vmatprep.subr.mxu0 0.0
    %125 = vmatpush1.xpose.msra.mxu0 0.0
    %126 = vmatprep.subr.mxu0 0.0
    %127 = vmatpush1.xpose.msra.mxu0 0.0
    %128 = vmatprep.subr.mxu0 0.0
    %129 = vmatpush1.xpose.msra.mxu0 0.0
    %130 = vmatprep.subr.mxu0 0.0
    %131 = vmatpush1.xpose.msra.mxu0 0.0
    %132 = vmatprep.subr.mxu0 0.0
    %133 = vmatpush1.xpose.msra.mxu0 0.0
    %134 = vmatprep.subr.mxu0 0.0
    %135 = vmatpush1.xpose.msra.mxu0 0.0
    %136 = vmatprep.subr.mxu0 0.0
    %137 = vmatpush1.xpose.msra.mxu0 0.0
    %138 = vmatprep.subr.mxu0 0.0
    %139 = vmatpush1.xpose.msra.mxu0 0.0
    %140 = vmatprep.subr.mxu0 0.0
    %141 = vmatpush1.xpose.msra.mxu0 0.0
    %142 = vmatprep.subr.mxu0 0.0
    %143 = vmatpush1.xpose.msra.mxu0 0.0
    %144 = vmatprep.subr.mxu0 0.0
    %145 = vmatpush1.xpose.msra.mxu0 0.0
    %146 = vmatprep.subr.mxu0 0.0
    %147 = vmatpush1.xpose.msra.mxu0 0.0
    %148 = vmatprep.subr.mxu0 0.0
    %149 = vmatpush1.xpose.msra.mxu0 0.0
    %150 = vmatprep.subr.mxu0 0.0
    %151 = vmatpush1.xpose.msra.mxu0 0.0
    %152 = vmatprep.subr.mxu0 0.0
    %153 = vmatpush1.xpose.msra.mxu0 0.0
    %154 = vmatprep.subr.mxu0 0.0
    %155 = vmatpush1.xpose.msra.mxu0 0.0
    %156 = vmatprep.subr.mxu0 0.0
    %157 = vmatpush1.xpose.msra.mxu0 0.0
    %158 = vmatprep.subr.mxu0 0.0
    %159 = vmatpush1.xpose.msra.mxu0 0.0
    %160 = vmatprep.subr.mxu0 0.0
    %161 = vmatpush1.xpose.msra.mxu0 0.0
    %162 = vmatprep.subr.mxu0 0.0
    %163 = vmatpush1.xpose.msra.mxu0 0.0
    %164 = vmatprep.subr.mxu0 0.0
    %165 = vmatpush1.xpose.msra.mxu0 0.0
    %166 = vmatprep.subr.mxu0 0.0
    %167 = vmatpush1.xpose.msra.mxu0 0.0
    %168 = vmatprep.subr.mxu0 0.0
    %169 = vmatpush1.xpose.msra.mxu0 0.0
    %170 = vmatprep.subr.mxu0 0.0
    %171 = vmatpush1.xpose.msra.mxu0 0.0
    %172 = vmatprep.subr.mxu0 0.0
    %173 = vmatpush1.xpose.msra.mxu0 0.0
    %174 = vmatprep.subr.mxu0 0.0
    %175 = vmatpush1.xpose.msra.mxu0 0.0
    %176 = vmatprep.subr.mxu0 0.0
    %177 = vmatpush1.xpose.msra.mxu0 0.0
    %178 = vmatprep.mubr.f32.mxu0 0.0
    %v179 = vand.u32 %v87, 4294901760
    %v180 = vsub.f32 %v87, %v179
    %v181 = vand.u32 %v180, 4294901760
    %v182 = vsub.f32 %v180, %v181
    %v183 = vand.u32 %v182, 4294901760
    %184 = vmatmul.mubr.f32.gmra.mrb[0].mxu0 %v183
    %v185 = vpop.f32.mrb[0].mxu0
    %v186 = vadd.f32 %v48, %v185
    %v187 = vpop.f32.mrb[0].mxu0
    %188 = vmatprep.mubr.f32.mxu0 0.0
    %v189 = vand.u32 %v90, 4294901760
    %v190 = vsub.f32 %v90, %v189
    %v191 = vand.u32 %v190, 4294901760
    %v192 = vsub.f32 %v190, %v191
    %v193 = vand.u32 %v192, 4294901760
    %194 = vmatmul.mubr.f32.gmra.mrb[0].mxu0 %v193
    %v195 = vpop.f32.mrb[0].mxu0
    %v196 = vadd.f32 %v53, %v195
    %v197 = vpop.f32.mrb[0].mxu0
    %198 = vmatprep.mubr.f32.mxu0 0.0
    %v199 = vand.u32 %v93, 4294901760
    %v200 = vsub.f32 %v93, %v199
    %v201 = vand.u32 %v200, 4294901760
    %v202 = vsub.f32 %v200, %v201
    %v203 = vand.u32 %v202, 4294901760
    %204 = vmatmul.mubr.f32.gmra.mrb[0].mxu0 %v203
    %v205 = vpop.f32.mrb[0].mxu0
    %v206 = vadd.f32 %v58, %v205
    %v207 = vpop.f32.mrb[0].mxu0
    %208 = vmatprep.mubr.f32.mxu0 0.0
    %v209 = vand.u32 %v96, 4294901760
    %v210 = vsub.f32 %v96, %v209
    %v211 = vand.u32 %v210, 4294901760
    %v212 = vsub.f32 %v210, %v211
    %v213 = vand.u32 %v212, 4294901760
    %214 = vmatmul.mubr.f32.gmra.mrb[0].mxu0 %v213
    %v215 = vpop.f32.mrb[0].mxu0
    %v216 = vadd.f32 %v63, %v215
    %v217 = vpop.f32.mrb[0].mxu0
    %218 = vmatprep.mubr.f32.mxu0 0.0
    %v219 = vand.u32 %v99, 4294901760
    %v220 = vsub.f32 %v99, %v219
    %v221 = vand.u32 %v220, 4294901760
    %v222 = vsub.f32 %v220, %v221
    %v223 = vand.u32 %v222, 4294901760
    %224 = vmatmul.mubr.f32.gmra.mrb[0].mxu0 %v223
    %v225 = vpop.f32.mrb[0].mxu0
    %v226 = vadd.f32 %v68, %v225
    %v227 = vpop.f32.mrb[0].mxu0
    %228 = vmatprep.mubr.f32.mxu0 0.0
    %v229 = vand.u32 %v102, 4294901760
    %v230 = vsub.f32 %v102, %v229
    %v231 = vand.u32 %v230, 4294901760
    %v232 = vsub.f32 %v230, %v231
    %v233 = vand.u32 %v232, 4294901760
    %234 = vmatmul.mubr.f32.gmra.mrb[0].mxu0 %v233
    %v235 = vpop.f32.mrb[0].mxu0
    %v236 = vadd.f32 %v73, %v235
    %v237 = vpop.f32.mrb[0].mxu0
    %238 = vmatprep.mubr.f32.mxu0 0.0
    %v239 = vand.u32 %v105, 4294901760
    %v240 = vsub.f32 %v105, %v239
    %v241 = vand.u32 %v240, 4294901760
    %v242 = vsub.f32 %v240, %v241
    %v243 = vand.u32 %v242, 4294901760
    %244 = vmatmul.mubr.f32.gmra.mrb[0].mxu0 %v243
    %v245 = vpop.f32.mrb[0].mxu0
    %v246 = vadd.f32 %v78, %v245
    %v247 = vpop.f32.mrb[0].mxu0
    %248 = vmatprep.mubr.f32.mxu0 0.0
    %v249 = vand.u32 %v108, 4294901760
    %v250 = vsub.f32 %v108, %v249
    %v251 = vand.u32 %v250, 4294901760
    %v252 = vsub.f32 %v250, %v251
    %v253 = vand.u32 %v252, 4294901760
    %254 = vmatmul.mubr.f32.gmra.mrb[0].mxu0 %v253
    %v255 = vpop.f32.mrb[0].mxu0
    %v256 = vadd.f32 %v83, %v255
    %v257 = vpop.f32.mrb[0].mxu0
    %258 = vdwg.mxu0
    %259 = vmatprep.subr.mxu0 0.0
    %v260 = vand.u32 %v111, 4294901760
    %v261 = vsub.f32 %v111, %v260
    %v262 = vand.u32 %v261, 4294901760
    %v263 = vsub.f32 %v261, %v262
    %v264 = vand.u32 %v263, 4294901760
    %265 = vmatpush1.xpose.msra.mxu0 %v264
    %266 = vmatprep.subr.mxu0 0.0
    %267 = vmatpush1.xpose.msra.mxu0 0.0
    %268 = vmatprep.subr.mxu0 0.0
    %269 = vmatpush1.xpose.msra.mxu0 0.0
    %270 = vmatprep.subr.mxu0 0.0
    %271 = vmatpush1.xpose.msra.mxu0 0.0
    %272 = vmatprep.subr.mxu0 0.0
    %273 = vmatpush1.xpose.msra.mxu0 0.0
    %274 = vmatprep.subr.mxu0 0.0
    %275 = vmatpush1.xpose.msra.mxu0 0.0
    %276 = vmatprep.subr.mxu0 0.0
    %277 = vmatpush1.xpose.msra.mxu0 0.0
    %278 = vmatprep.subr.mxu0 0.0
    %279 = vmatpush1.xpose.msra.mxu0 0.0
    %280 = vmatprep.subr.mxu0 0.0
    %281 = vmatpush1.xpose.msra.mxu0 0.0
    %282 = vmatprep.subr.mxu0 0.0
    %283 = vmatpush1.xpose.msra.mxu0 0.0
    %284 = vmatprep.subr.mxu0 0.0
    %285 = vmatpush1.xpose.msra.mxu0 0.0
    %286 = vmatprep.subr.mxu0 0.0
    %287 = vmatpush1.xpose.msra.mxu0 0.0
    %288 = vmatprep.subr.mxu0 0.0
    %289 = vmatpush1.xpose.msra.mxu0 0.0
    %290 = vmatprep.subr.mxu0 0.0
    %291 = vmatpush1.xpose.msra.mxu0 0.0
    %292 = vmatprep.subr.mxu0 0.0
    %293 = vmatpush1.xpose.msra.mxu0 0.0
    %294 = vmatprep.subr.mxu0 0.0
    %295 = vmatpush1.xpose.msra.mxu0 0.0
    %296 = vmatprep.subr.mxu0 0.0
    %297 = vmatpush1.xpose.msra.mxu0 0.0
    %298 = vmatprep.subr.mxu0 0.0
    %299 = vmatpush1.xpose.msra.mxu0 0.0
    %300 = vmatprep.subr.mxu0 0.0
    %301 = vmatpush1.xpose.msra.mxu0 0.0
    %302 = vmatprep.subr.mxu0 0.0
    %303 = vmatpush1.xpose.msra.mxu0 0.0
    %304 = vmatprep.subr.mxu0 0.0
    %305 = vmatpush1.xpose.msra.mxu0 0.0
    %306 = vmatprep.subr.mxu0 0.0
    %307 = vmatpush1.xpose.msra.mxu0 0.0
    %308 = vmatprep.subr.mxu0 0.0
    %309 = vmatpush1.xpose.msra.mxu0 0.0
    %310 = vmatprep.subr.mxu0 0.0
    %311 = vmatpush1.xpose.msra.mxu0 0.0
    %312 = vmatprep.subr.mxu0 0.0
    %313 = vmatpush1.xpose.msra.mxu0 0.0
    %314 = vmatprep.subr.mxu0 0.0
    %315 = vmatpush1.xpose.msra.mxu0 0.0
    %316 = vmatprep.subr.mxu0 0.0
    %317 = vmatpush1.xpose.msra.mxu0 0.0
    %318 = vmatprep.subr.mxu0 0.0
    %319 = vmatpush1.xpose.msra.mxu0 0.0
    %320 = vmatprep.subr.mxu0 0.0
    %321 = vmatpush1.xpose.msra.mxu0 0.0
    %322 = vmatprep.subr.mxu0 0.0
    %323 = vmatpush1.xpose.msra.mxu0 0.0
    %324 = vmatprep.subr.mxu0 0.0
    %325 = vmatpush1.xpose.msra.mxu0 0.0
    %326 = vmatprep.subr.mxu0 0.0
    %327 = vmatpush1.xpose.msra.mxu0 0.0
    %328 = vmatprep.mubr.f32.mxu0 0.0
    %v329 = vand.u32 %v87, 4294901760
    %330 = vmatmul.mubr.f32.gmra.mrb[0].mxu0 %v329
    %v331 = vpop.f32.mrb[0].mxu0
    %v332 = vadd.f32 %v186, %v331
    %v333 = vpop.f32.mrb[0].mxu0
    %334 = vmatprep.mubr.f32.mxu0 0.0
    %v335 = vand.u32 %v90, 4294901760
    %336 = vmatmul.mubr.f32.gmra.mrb[0].mxu0 %v335
    %v337 = vpop.f32.mrb[0].mxu0
    %v338 = vadd.f32 %v196, %v337
    %v339 = vpop.f32.mrb[0].mxu0
    %340 = vmatprep.mubr.f32.mxu0 0.0
    %v341 = vand.u32 %v93, 4294901760
    %342 = vmatmul.mubr.f32.gmra.mrb[0].mxu0 %v341
    %v343 = vpop.f32.mrb[0].mxu0
    %v344 = vadd.f32 %v206, %v343
    %v345 = vpop.f32.mrb[0].mxu0
    %346 = vmatprep.mubr.f32.mxu0 0.0
    %v347 = vand.u32 %v96, 4294901760
    %348 = vmatmul.mubr.f32.gmra.mrb[0].mxu0 %v347
    %v349 = vpop.f32.mrb[0].mxu0
    %v350 = vadd.f32 %v216, %v349
    %v351 = vpop.f32.mrb[0].mxu0
    %352 = vmatprep.mubr.f32.mxu0 0.0
    %v353 = vand.u32 %v99, 4294901760
    %354 = vmatmul.mubr.f32.gmra.mrb[0].mxu0 %v353
    %v355 = vpop.f32.mrb[0].mxu0
    %v356 = vadd.f32 %v226, %v355
    %v357 = vpop.f32.mrb[0].mxu0
    %358 = vmatprep.mubr.f32.mxu0 0.0
    %v359 = vand.u32 %v102, 4294901760
    %360 = vmatmul.mubr.f32.gmra.mrb[0].mxu0 %v359
    %v361 = vpop.f32.mrb[0].mxu0
    %v362 = vadd.f32 %v236, %v361
    %v363 = vpop.f32.mrb[0].mxu0
    %364 = vmatprep.mubr.f32.mxu0 0.0
    %v365 = vand.u32 %v105, 4294901760
    %366 = vmatmul.mubr.f32.gmra.mrb[0].mxu0 %v365
    %v367 = vpop.f32.mrb[0].mxu0
    %v368 = vadd.f32 %v246, %v367
    %v369 = vpop.f32.mrb[0].mxu0
    %370 = vmatprep.mubr.f32.mxu0 0.0
    %v371 = vand.u32 %v108, 4294901760
    %372 = vmatmul.mubr.f32.gmra.mrb[0].mxu0 %v371
    %v373 = vpop.f32.mrb[0].mxu0
    %v374 = vadd.f32 %v256, %v373
    %v375 = vpop.f32.mrb[0].mxu0
    %376 = vdwg.mxu0
    %377 = vmatprep.subr.mxu0 0.0
    %v378 = vand.u32 %v111, 4294901760
    %v379 = vsub.f32 %v111, %v378
    %380 = vmatpush1.xpose.msra.mxu0 %v379
    %381 = vmatprep.subr.mxu0 0.0
    %382 = vmatpush1.xpose.msra.mxu0 0.0
    %383 = vmatprep.subr.mxu0 0.0
    %384 = vmatpush1.xpose.msra.mxu0 0.0
    %385 = vmatprep.subr.mxu0 0.0
    %386 = vmatpush1.xpose.msra.mxu0 0.0
    %387 = vmatprep.subr.mxu0 0.0
    %388 = vmatpush1.xpose.msra.mxu0 0.0
    %389 = vmatprep.subr.mxu0 0.0
    %390 = vmatpush1.xpose.msra.mxu0 0.0
    %391 = vmatprep.subr.mxu0 0.0
    %392 = vmatpush1.xpose.msra.mxu0 0.0
    %393 = vmatprep.subr.mxu0 0.0
    %394 = vmatpush1.xpose.msra.mxu0 0.0
    %395 = vmatprep.subr.mxu0 0.0
    %396 = vmatpush1.xpose.msra.mxu0 0.0
    %397 = vmatprep.subr.mxu0 0.0
    %398 = vmatpush1.xpose.msra.mxu0 0.0
    %399 = vmatprep.subr.mxu0 0.0
    %400 = vmatpush1.xpose.msra.mxu0 0.0
    %401 = vmatprep.subr.mxu0 0.0
    %402 = vmatpush1.xpose.msra.mxu0 0.0
    %403 = vmatprep.subr.mxu0 0.0
    %404 = vmatpush1.xpose.msra.mxu0 0.0
    %405 = vmatprep.subr.mxu0 0.0
    %406 = vmatpush1.xpose.msra.mxu0 0.0
    %407 = vmatprep.subr.mxu0 0.0
    %408 = vmatpush1.xpose.msra.mxu0 0.0
    %409 = vmatprep.subr.mxu0 0.0
    %410 = vmatpush1.xpose.msra.mxu0 0.0
    %411 = vmatprep.subr.mxu0 0.0
    %412 = vmatpush1.xpose.msra.mxu0 0.0
    %413 = vmatprep.subr.mxu0 0.0
    %414 = vmatpush1.xpose.msra.mxu0 0.0
    %415 = vmatprep.subr.mxu0 0.0
    %416 = vmatpush1.xpose.msra.mxu0 0.0
    %417 = vmatprep.subr.mxu0 0.0
    %418 = vmatpush1.xpose.msra.mxu0 0.0
    %419 = vmatprep.subr.mxu0 0.0
    %420 = vmatpush1.xpose.msra.mxu0 0.0
    %421 = vmatprep.subr.mxu0 0.0
    %422 = vmatpush1.xpose.msra.mxu0 0.0
    %423 = vmatprep.subr.mxu0 0.0
    %424 = vmatpush1.xpose.msra.mxu0 0.0
    %425 = vmatprep.subr.mxu0 0.0
    %426 = vmatpush1.xpose.msra.mxu0 0.0
    %427 = vmatprep.subr.mxu0 0.0
    %428 = vmatpush1.xpose.msra.mxu0 0.0
    %429 = vmatprep.subr.mxu0 0.0
    %430 = vmatpush1.xpose.msra.mxu0 0.0
    %431 = vmatprep.subr.mxu0 0.0
    %432 = vmatpush1.xpose.msra.mxu0 0.0
    %433 = vmatprep.subr.mxu0 0.0
    %434 = vmatpush1.xpose.msra.mxu0 0.0
    %435 = vmatprep.subr.mxu0 0.0
    %436 = vmatpush1.xpose.msra.mxu0 0.0
    %437 = vmatprep.subr.mxu0 0.0
    %438 = vmatpush1.xpose.msra.mxu0 0.0
    %439 = vmatprep.subr.mxu0 0.0
    %440 = vmatpush1.xpose.msra.mxu0 0.0
    %441 = vmatprep.subr.mxu0 0.0
    %442 = vmatpush1.xpose.msra.mxu0 0.0
    %443 = vmatprep.mubr.f32.mxu0 0.0
    %v444 = vand.u32 %v87, 4294901760
    %v445 = vsub.f32 %v87, %v444
    %446 = vmatmul.mubr.f32.gmra.mrb[0].mxu0 %v445
    %v447 = vpop.f32.mrb[0].mxu0
    %v448 = vadd.f32 %v332, %v447
    %v449 = vpop.f32.mrb[0].mxu0
    %450 = vmatprep.mubr.f32.mxu0 0.0
    %v451 = vand.u32 %v90, 4294901760
    %v452 = vsub.f32 %v90, %v451
    %453 = vmatmul.mubr.f32.gmra.mrb[0].mxu0 %v452
    %v454 = vpop.f32.mrb[0].mxu0
    %v455 = vadd.f32 %v338, %v454
    %v456 = vpop.f32.mrb[0].mxu0
    %457 = vmatprep.mubr.f32.mxu0 0.0
    %v458 = vand.u32 %v93, 4294901760
    %v459 = vsub.f32 %v93, %v458
    %460 = vmatmul.mubr.f32.gmra.mrb[0].mxu0 %v459
    %v461 = vpop.f32.mrb[0].mxu0
    %v462 = vadd.f32 %v344, %v461
    %v463 = vpop.f32.mrb[0].mxu0
    %464 = vmatprep.mubr.f32.mxu0 0.0
    %v465 = vand.u32 %v96, 4294901760
    %v466 = vsub.f32 %v96, %v465
    %467 = vmatmul.mubr.f32.gmra.mrb[0].mxu0 %v466
    %v468 = vpop.f32.mrb[0].mxu0
    %v469 = vadd.f32 %v350, %v468
    %v470 = vpop.f32.mrb[0].mxu0
    %471 = vmatprep.mubr.f32.mxu0 0.0
    %v472 = vand.u32 %v99, 4294901760
    %v473 = vsub.f32 %v99, %v472
    %474 = vmatmul.mubr.f32.gmra.mrb[0].mxu0 %v473
    %v475 = vpop.f32.mrb[0].mxu0
    %v476 = vadd.f32 %v356, %v475
    %v477 = vpop.f32.mrb[0].mxu0
    %478 = vmatprep.mubr.f32.mxu0 0.0
    %v479 = vand.u32 %v102, 4294901760
    %v480 = vsub.f32 %v102, %v479
    %481 = vmatmul.mubr.f32.gmra.mrb[0].mxu0 %v480
    %v482 = vpop.f32.mrb[0].mxu0
    %v483 = vadd.f32 %v362, %v482
    %v484 = vpop.f32.mrb[0].mxu0
    %485 = vmatprep.mubr.f32.mxu0 0.0
    %v486 = vand.u32 %v105, 4294901760
    %v487 = vsub.f32 %v105, %v486
    %488 = vmatmul.mubr.f32.gmra.mrb[0].mxu0 %v487
    %v489 = vpop.f32.mrb[0].mxu0
    %v490 = vadd.f32 %v368, %v489
    %v491 = vpop.f32.mrb[0].mxu0
    %492 = vmatprep.mubr.f32.mxu0 0.0
    %v493 = vand.u32 %v108, 4294901760
    %v494 = vsub.f32 %v108, %v493
    %495 = vmatmul.mubr.f32.gmra.mrb[0].mxu0 %v494
    %v496 = vpop.f32.mrb[0].mxu0
    %v497 = vadd.f32 %v374, %v496
    %v498 = vpop.f32.mrb[0].mxu0
    %499 = vdwg.mxu0
    %500 = vmatprep.subr.mxu0 0.0
    %v501 = vand.u32 %v111, 4294901760
    %502 = vmatpush1.xpose.msra.mxu0 %v501
    %503 = vmatprep.subr.mxu0 0.0
    %504 = vmatpush1.xpose.msra.mxu0 0.0
    %505 = vmatprep.subr.mxu0 0.0
    %506 = vmatpush1.xpose.msra.mxu0 0.0
    %507 = vmatprep.subr.mxu0 0.0
    %508 = vmatpush1.xpose.msra.mxu0 0.0
    %509 = vmatprep.subr.mxu0 0.0
    %510 = vmatpush1.xpose.msra.mxu0 0.0
    %511 = vmatprep.subr.mxu0 0.0
    %512 = vmatpush1.xpose.msra.mxu0 0.0
    %513 = vmatprep.subr.mxu0 0.0
    %514 = vmatpush1.xpose.msra.mxu0 0.0
    %515 = vmatprep.subr.mxu0 0.0
    %516 = vmatpush1.xpose.msra.mxu0 0.0
    %517 = vmatprep.subr.mxu0 0.0
    %518 = vmatpush1.xpose.msra.mxu0 0.0
    %519 = vmatprep.subr.mxu0 0.0
    %520 = vmatpush1.xpose.msra.mxu0 0.0
    %521 = vmatprep.subr.mxu0 0.0
    %522 = vmatpush1.xpose.msra.mxu0 0.0
    %523 = vmatprep.subr.mxu0 0.0
    %524 = vmatpush1.xpose.msra.mxu0 0.0
    %525 = vmatprep.subr.mxu0 0.0
    %526 = vmatpush1.xpose.msra.mxu0 0.0
    %527 = vmatprep.subr.mxu0 0.0
    %528 = vmatpush1.xpose.msra.mxu0 0.0
    %529 = vmatprep.subr.mxu0 0.0
    %530 = vmatpush1.xpose.msra.mxu0 0.0
    %531 = vmatprep.subr.mxu0 0.0
    %532 = vmatpush1.xpose.msra.mxu0 0.0
    %533 = vmatprep.subr.mxu0 0.0
    %534 = vmatpush1.xpose.msra.mxu0 0.0
    %535 = vmatprep.subr.mxu0 0.0
    %536 = vmatpush1.xpose.msra.mxu0 0.0
    %537 = vmatprep.subr.mxu0 0.0
    %538 = vmatpush1.xpose.msra.mxu0 0.0
    %539 = vmatprep.subr.mxu0 0.0
    %540 = vmatpush1.xpose.msra.mxu0 0.0
    %541 = vmatprep.subr.mxu0 0.0
    %542 = vmatpush1.xpose.msra.mxu0 0.0
    %543 = vmatprep.subr.mxu0 0.0
    %544 = vmatpush1.xpose.msra.mxu0 0.0
    %545 = vmatprep.subr.mxu0 0.0
    %546 = vmatpush1.xpose.msra.mxu0 0.0
    %547 = vmatprep.subr.mxu0 0.0
    %548 = vmatpush1.xpose.msra.mxu0 0.0
    %549 = vmatprep.subr.mxu0 0.0
    %550 = vmatpush1.xpose.msra.mxu0 0.0
    %551 = vmatprep.subr.mxu0 0.0
    %552 = vmatpush1.xpose.msra.mxu0 0.0
    %553 = vmatprep.subr.mxu0 0.0
    %554 = vmatpush1.xpose.msra.mxu0 0.0
    %555 = vmatprep.subr.mxu0 0.0
    %556 = vmatpush1.xpose.msra.mxu0 0.0
    %557 = vmatprep.subr.mxu0 0.0
    %558 = vmatpush1.xpose.msra.mxu0 0.0
    %559 = vmatprep.subr.mxu0 0.0
    %560 = vmatpush1.xpose.msra.mxu0 0.0
    %561 = vmatprep.subr.mxu0 0.0
    %562 = vmatpush1.xpose.msra.mxu0 0.0
    %563 = vmatprep.subr.mxu0 0.0
    %564 = vmatpush1.xpose.msra.mxu0 0.0
    %565 = vmatprep.mubr.f32.mxu0 0.0
    %v566 = vand.u32 %v87, 4294901760
    %v567 = vsub.f32 %v87, %v566
    %v568 = vand.u32 %v567, 4294901760
    %569 = vmatmul.mubr.f32.gmra.mrb[0].mxu0 %v568
    %v570 = vpop.f32.mrb[0].mxu0
    %v571 = vadd.f32 %v448, %v570
    %v572 = vpop.f32.mrb[0].mxu0
    %573 = vmatprep.mubr.f32.mxu0 0.0
    %v574 = vand.u32 %v90, 4294901760
    %v575 = vsub.f32 %v90, %v574
    %v576 = vand.u32 %v575, 4294901760
    %577 = vmatmul.mubr.f32.gmra.mrb[0].mxu0 %v576
    %v578 = vpop.f32.mrb[0].mxu0
    %v579 = vadd.f32 %v455, %v578
    %v580 = vpop.f32.mrb[0].mxu0
    %581 = vmatprep.mubr.f32.mxu0 0.0
    %v582 = vand.u32 %v93, 4294901760
    %v583 = vsub.f32 %v93, %v582
    %v584 = vand.u32 %v583, 4294901760
    %585 = vmatmul.mubr.f32.gmra.mrb[0].mxu0 %v584
    %v586 = vpop.f32.mrb[0].mxu0
    %v587 = vadd.f32 %v462, %v586
    %v588 = vpop.f32.mrb[0].mxu0
    %589 = vmatprep.mubr.f32.mxu0 0.0
    %v590 = vand.u32 %v96, 4294901760
    %v591 = vsub.f32 %v96, %v590
    %v592 = vand.u32 %v591, 4294901760
    %593 = vmatmul.mubr.f32.gmra.mrb[0].mxu0 %v592
    %v594 = vpop.f32.mrb[0].mxu0
    %v595 = vadd.f32 %v469, %v594
    %v596 = vpop.f32.mrb[0].mxu0
    %597 = vmatprep.mubr.f32.mxu0 0.0
    %v598 = vand.u32 %v99, 4294901760
    %v599 = vsub.f32 %v99, %v598
    %v600 = vand.u32 %v599, 4294901760
    %601 = vmatmul.mubr.f32.gmra.mrb[0].mxu0 %v600
    %v602 = vpop.f32.mrb[0].mxu0
    %v603 = vadd.f32 %v476, %v602
    %v604 = vpop.f32.mrb[0].mxu0
    %605 = vmatprep.mubr.f32.mxu0 0.0
    %v606 = vand.u32 %v102, 4294901760
    %v607 = vsub.f32 %v102, %v606
    %v608 = vand.u32 %v607, 4294901760
    %609 = vmatmul.mubr.f32.gmra.mrb[0].mxu0 %v608
    %v610 = vpop.f32.mrb[0].mxu0
    %v611 = vadd.f32 %v483, %v610
    %v612 = vpop.f32.mrb[0].mxu0
    %613 = vmatprep.mubr.f32.mxu0 0.0
    %v614 = vand.u32 %v105, 4294901760
    %v615 = vsub.f32 %v105, %v614
    %v616 = vand.u32 %v615, 4294901760
    %617 = vmatmul.mubr.f32.gmra.mrb[0].mxu0 %v616
    %v618 = vpop.f32.mrb[0].mxu0
    %v619 = vadd.f32 %v490, %v618
    %v620 = vpop.f32.mrb[0].mxu0
    %621 = vmatprep.mubr.f32.mxu0 0.0
    %v622 = vand.u32 %v108, 4294901760
    %v623 = vsub.f32 %v108, %v622
    %v624 = vand.u32 %v623, 4294901760
    %625 = vmatmul.mubr.f32.gmra.mrb[0].mxu0 %v624
    %v626 = vpop.f32.mrb[0].mxu0
    %v627 = vadd.f32 %v497, %v626
    %v628 = vpop.f32.mrb[0].mxu0
    %629 = vdwg.mxu0
    %630 = vmatprep.subr.mxu0 0.0
    %v631 = vand.u32 %v111, 4294901760
    %v632 = vsub.f32 %v111, %v631
    %v633 = vand.u32 %v632, 4294901760
    %634 = vmatpush1.xpose.msra.mxu0 %v633
    %635 = vmatprep.subr.mxu0 0.0
    %636 = vmatpush1.xpose.msra.mxu0 0.0
    %637 = vmatprep.subr.mxu0 0.0
    %638 = vmatpush1.xpose.msra.mxu0 0.0
    %639 = vmatprep.subr.mxu0 0.0
    %640 = vmatpush1.xpose.msra.mxu0 0.0
    %641 = vmatprep.subr.mxu0 0.0
    %642 = vmatpush1.xpose.msra.mxu0 0.0
    %643 = vmatprep.subr.mxu0 0.0
    %644 = vmatpush1.xpose.msra.mxu0 0.0
    %645 = vmatprep.subr.mxu0 0.0
    %646 = vmatpush1.xpose.msra.mxu0 0.0
    %647 = vmatprep.subr.mxu0 0.0
    %648 = vmatpush1.xpose.msra.mxu0 0.0
    %649 = vmatprep.subr.mxu0 0.0
    %650 = vmatpush1.xpose.msra.mxu0 0.0
    %651 = vmatprep.subr.mxu0 0.0
    %652 = vmatpush1.xpose.msra.mxu0 0.0
    %653 = vmatprep.subr.mxu0 0.0
    %654 = vmatpush1.xpose.msra.mxu0 0.0
    %655 = vmatprep.subr.mxu0 0.0
    %656 = vmatpush1.xpose.msra.mxu0 0.0
    %657 = vmatprep.subr.mxu0 0.0
    %658 = vmatpush1.xpose.msra.mxu0 0.0
    %659 = vmatprep.subr.mxu0 0.0
    %660 = vmatpush1.xpose.msra.mxu0 0.0
    %661 = vmatprep.subr.mxu0 0.0
    %662 = vmatpush1.xpose.msra.mxu0 0.0
    %663 = vmatprep.subr.mxu0 0.0
    %664 = vmatpush1.xpose.msra.mxu0 0.0
    %665 = vmatprep.subr.mxu0 0.0
    %666 = vmatpush1.xpose.msra.mxu0 0.0
    %667 = vmatprep.subr.mxu0 0.0
    %668 = vmatpush1.xpose.msra.mxu0 0.0
    %669 = vmatprep.subr.mxu0 0.0
    %670 = vmatpush1.xpose.msra.mxu0 0.0
    %671 = vmatprep.subr.mxu0 0.0
    %672 = vmatpush1.xpose.msra.mxu0 0.0
    %673 = vmatprep.subr.mxu0 0.0
    %674 = vmatpush1.xpose.msra.mxu0 0.0
    %675 = vmatprep.subr.mxu0 0.0
    %676 = vmatpush1.xpose.msra.mxu0 0.0
    %677 = vmatprep.subr.mxu0 0.0
    %678 = vmatpush1.xpose.msra.mxu0 0.0
    %679 = vmatprep.subr.mxu0 0.0
    %680 = vmatpush1.xpose.msra.mxu0 0.0
    %681 = vmatprep.subr.mxu0 0.0
    %682 = vmatpush1.xpose.msra.mxu0 0.0
    %683 = vmatprep.subr.mxu0 0.0
    %684 = vmatpush1.xpose.msra.mxu0 0.0
    %685 = vmatprep.subr.mxu0 0.0
    %686 = vmatpush1.xpose.msra.mxu0 0.0
    %687 = vmatprep.subr.mxu0 0.0
    %688 = vmatpush1.xpose.msra.mxu0 0.0
    %689 = vmatprep.subr.mxu0 0.0
    %690 = vmatpush1.xpose.msra.mxu0 0.0
    %691 = vmatprep.subr.mxu0 0.0
    %692 = vmatpush1.xpose.msra.mxu0 0.0
    %693 = vmatprep.subr.mxu0 0.0
    %694 = vmatpush1.xpose.msra.mxu0 0.0
    %695 = vmatprep.subr.mxu0 0.0
    %696 = vmatpush1.xpose.msra.mxu0 0.0
    %697 = vmatprep.mubr.f32.mxu0 0.0
    %v698 = vand.u32 %v87, 4294901760
    %699 = vmatmul.mubr.f32.gmra.mrb[0].mxu0 %v698
    %v700 = vpop.f32.mrb[0].mxu0
    %v701 = vadd.f32 %v571, %v700
    %v702 = vpop.f32.mrb[0].mxu0
    %703 = vmatprep.mubr.f32.mxu0 0.0
    %v704 = vand.u32 %v90, 4294901760
    %705 = vmatmul.mubr.f32.gmra.mrb[0].mxu0 %v704
    %v706 = vpop.f32.mrb[0].mxu0
    %v707 = vadd.f32 %v579, %v706
    %v708 = vpop.f32.mrb[0].mxu0
    %709 = vmatprep.mubr.f32.mxu0 0.0
    %v710 = vand.u32 %v93, 4294901760
    %711 = vmatmul.mubr.f32.gmra.mrb[0].mxu0 %v710
    %v712 = vpop.f32.mrb[0].mxu0
    %v713 = vadd.f32 %v587, %v712
    %v714 = vpop.f32.mrb[0].mxu0
    %715 = vmatprep.mubr.f32.mxu0 0.0
    %v716 = vand.u32 %v96, 4294901760
    %717 = vmatmul.mubr.f32.gmra.mrb[0].mxu0 %v716
    %v718 = vpop.f32.mrb[0].mxu0
    %v719 = vadd.f32 %v595, %v718
    %v720 = vpop.f32.mrb[0].mxu0
    %721 = vmatprep.mubr.f32.mxu0 0.0
    %v722 = vand.u32 %v99, 4294901760
    %723 = vmatmul.mubr.f32.gmra.mrb[0].mxu0 %v722
    %v724 = vpop.f32.mrb[0].mxu0
    %v725 = vadd.f32 %v603, %v724
    %v726 = vpop.f32.mrb[0].mxu0
    %727 = vmatprep.mubr.f32.mxu0 0.0
    %v728 = vand.u32 %v102, 4294901760
    %729 = vmatmul.mubr.f32.gmra.mrb[0].mxu0 %v728
    %v730 = vpop.f32.mrb[0].mxu0
    %v731 = vadd.f32 %v611, %v730
    %v732 = vpop.f32.mrb[0].mxu0
    %733 = vmatprep.mubr.f32.mxu0 0.0
    %v734 = vand.u32 %v105, 4294901760
    %735 = vmatmul.mubr.f32.gmra.mrb[0].mxu0 %v734
    %v736 = vpop.f32.mrb[0].mxu0
    %v737 = vadd.f32 %v619, %v736
    %v738 = vpop.f32.mrb[0].mxu0
    %739 = vmatprep.mubr.f32.mxu0 0.0
    %v740 = vand.u32 %v108, 4294901760
    %741 = vmatmul.mubr.f32.gmra.mrb[0].mxu0 %v740
    %v742 = vpop.f32.mrb[0].mxu0
    %v743 = vadd.f32 %v627, %v742
    %v744 = vpop.f32.mrb[0].mxu0
    %745 = vdwg.mxu0
    %746 = vmatprep.subr.mxu0 0.0
    %v747 = vand.u32 %v111, 4294901760
    %748 = vmatpush1.xpose.msra.mxu0 %v747
    %749 = vmatprep.subr.mxu0 0.0
    %750 = vmatpush1.xpose.msra.mxu0 0.0
    %751 = vmatprep.subr.mxu0 0.0
    %752 = vmatpush1.xpose.msra.mxu0 0.0
    %753 = vmatprep.subr.mxu0 0.0
    %754 = vmatpush1.xpose.msra.mxu0 0.0
    %755 = vmatprep.subr.mxu0 0.0
    %756 = vmatpush1.xpose.msra.mxu0 0.0
    %757 = vmatprep.subr.mxu0 0.0
    %758 = vmatpush1.xpose.msra.mxu0 0.0
    %759 = vmatprep.subr.mxu0 0.0
    %760 = vmatpush1.xpose.msra.mxu0 0.0
    %761 = vmatprep.subr.mxu0 0.0
    %762 = vmatpush1.xpose.msra.mxu0 0.0
    %763 = vmatprep.subr.mxu0 0.0
    %764 = vmatpush1.xpose.msra.mxu0 0.0
    %765 = vmatprep.subr.mxu0 0.0
    %766 = vmatpush1.xpose.msra.mxu0 0.0
    %767 = vmatprep.subr.mxu0 0.0
    %768 = vmatpush1.xpose.msra.mxu0 0.0
    %769 = vmatprep.subr.mxu0 0.0
    %770 = vmatpush1.xpose.msra.mxu0 0.0
    %771 = vmatprep.subr.mxu0 0.0
    %772 = vmatpush1.xpose.msra.mxu0 0.0
    %773 = vmatprep.subr.mxu0 0.0
    %774 = vmatpush1.xpose.msra.mxu0 0.0
    %775 = vmatprep.subr.mxu0 0.0
    %776 = vmatpush1.xpose.msra.mxu0 0.0
    %777 = vmatprep.subr.mxu0 0.0
    %778 = vmatpush1.xpose.msra.mxu0 0.0
    %779 = vmatprep.subr.mxu0 0.0
    %780 = vmatpush1.xpose.msra.mxu0 0.0
    %781 = vmatprep.subr.mxu0 0.0
    %782 = vmatpush1.xpose.msra.mxu0 0.0
    %783 = vmatprep.subr.mxu0 0.0
    %784 = vmatpush1.xpose.msra.mxu0 0.0
    %785 = vmatprep.subr.mxu0 0.0
    %786 = vmatpush1.xpose.msra.mxu0 0.0
    %787 = vmatprep.subr.mxu0 0.0
    %788 = vmatpush1.xpose.msra.mxu0 0.0
    %789 = vmatprep.subr.mxu0 0.0
    %790 = vmatpush1.xpose.msra.mxu0 0.0
    %791 = vmatprep.subr.mxu0 0.0
    %792 = vmatpush1.xpose.msra.mxu0 0.0
    %793 = vmatprep.subr.mxu0 0.0
    %794 = vmatpush1.xpose.msra.mxu0 0.0
    %795 = vmatprep.subr.mxu0 0.0
    %796 = vmatpush1.xpose.msra.mxu0 0.0
    %797 = vmatprep.subr.mxu0 0.0
    %798 = vmatpush1.xpose.msra.mxu0 0.0
    %799 = vmatprep.subr.mxu0 0.0
    %800 = vmatpush1.xpose.msra.mxu0 0.0
    %801 = vmatprep.subr.mxu0 0.0
    %802 = vmatpush1.xpose.msra.mxu0 0.0
    %803 = vmatprep.subr.mxu0 0.0
    %804 = vmatpush1.xpose.msra.mxu0 0.0
    %805 = vmatprep.subr.mxu0 0.0
    %806 = vmatpush1.xpose.msra.mxu0 0.0
    %807 = vmatprep.subr.mxu0 0.0
    %808 = vmatpush1.xpose.msra.mxu0 0.0
    %809 = vmatprep.subr.mxu0 0.0
    %810 = vmatpush1.xpose.msra.mxu0 0.0
    %811 = vmatprep.mubr.f32.mxu0 0.0
    %v812 = vand.u32 %v87, 4294901760
    %813 = vmatmul.mubr.f32.gmra.mrb[0].mxu0 %v812
    %v814 = vpop.f32.mrb[0].mxu0
    %v815 = vadd.f32 %v701, %v814
    %v816 = vpop.f32.mrb[0].mxu0
    %817 = vmatprep.mubr.f32.mxu0 0.0
    %v818 = vand.u32 %v90, 4294901760
    %819 = vmatmul.mubr.f32.gmra.mrb[0].mxu0 %v818
    %v820 = vpop.f32.mrb[0].mxu0
    %v821 = vadd.f32 %v707, %v820
    %v822 = vpop.f32.mrb[0].mxu0
    %823 = vmatprep.mubr.f32.mxu0 0.0
    %v824 = vand.u32 %v93, 4294901760
    %825 = vmatmul.mubr.f32.gmra.mrb[0].mxu0 %v824
    %v826 = vpop.f32.mrb[0].mxu0
    %v827 = vadd.f32 %v713, %v826
    %v828 = vpop.f32.mrb[0].mxu0
    %829 = vmatprep.mubr.f32.mxu0 0.0
    %v830 = vand.u32 %v96, 4294901760
    %831 = vmatmul.mubr.f32.gmra.mrb[0].mxu0 %v830
    %v832 = vpop.f32.mrb[0].mxu0
    %v833 = vadd.f32 %v719, %v832
    %v834 = vpop.f32.mrb[0].mxu0
    %835 = vmatprep.mubr.f32.mxu0 0.0
    %v836 = vand.u32 %v99, 4294901760
    %837 = vmatmul.mubr.f32.gmra.mrb[0].mxu0 %v836
    %v838 = vpop.f32.mrb[0].mxu0
    %v839 = vadd.f32 %v725, %v838
    %v840 = vpop.f32.mrb[0].mxu0
    %841 = vmatprep.mubr.f32.mxu0 0.0
    %v842 = vand.u32 %v102, 4294901760
    %843 = vmatmul.mubr.f32.gmra.mrb[0].mxu0 %v842
    %v844 = vpop.f32.mrb[0].mxu0
    %v845 = vadd.f32 %v731, %v844
    %v846 = vpop.f32.mrb[0].mxu0
    %847 = vmatprep.mubr.f32.mxu0 0.0
    %v848 = vand.u32 %v105, 4294901760
    %849 = vmatmul.mubr.f32.gmra.mrb[0].mxu0 %v848
    %v850 = vpop.f32.mrb[0].mxu0
    %v851 = vadd.f32 %v737, %v850
    %v852 = vpop.f32.mrb[0].mxu0
    %853 = vmatprep.mubr.f32.mxu0 0.0
    %v854 = vand.u32 %v108, 4294901760
    %855 = vmatmul.mubr.f32.gmra.mrb[0].mxu0 %v854
    %v856 = vpop.f32.mrb[0].mxu0
    %v857 = vadd.f32 %v743, %v856
    %v858 = vpop.f32.mrb[0].mxu0
    %859 = vdwg.mxu0
    %v860 = vmax.f32 %v815, 0.0
    %v861 = vmax.f32 %v821, 0.0
    %v862 = vmax.f32 %v827, 0.0
    %v863 = vmax.f32 %v833, 0.0
    %v864 = vmax.f32 %v839, 0.0
    %v865 = vmax.f32 %v845, 0.0
    %v866 = vmax.f32 %v851, 0.0
    %v867 = vmax.f32 %v857, 0.0
    %v868 = vld [vmem:[%s3] sm:$0xff]
    %v869 = vld [vmem:[%s3 + $0x8] sm:$0xff]
    %v870 = vld [vmem:[%s3 + $0x10] sm:$0xff]
    %v871 = vld [vmem:[%s3 + $0x18] sm:$0xff]
    %v872 = vld [vmem:[%s3 + $0x20] sm:$0xff]
    %v873 = vld [vmem:[%s3 + $0x28] sm:$0xff]
    %v874 = vld [vmem:[%s3 + $0x30] sm:$0xff]
    %v875 = vld [vmem:[%s3 + $0x38] sm:$0xff]
    %v876 = vld [vmem:[%s4] sm:$0xff]
    %v877 = vld [vmem:[%s4 + $0x8] sm:$0xff]
    %v878 = vld [vmem:[%s4 + $0x10] sm:$0xff]
    %v879 = vld [vmem:[%s4 + $0x18] sm:$0xff]
    %v880 = vld [vmem:[%s4 + $0x20] sm:$0xff]
    %v881 = vld [vmem:[%s4 + $0x28] sm:$0xff]
    %v882 = vld [vmem:[%s4 + $0x30] sm:$0xff]
    %v883 = vld [vmem:[%s4 + $0x38] sm:$0xff]
    %885 = vset.pattern.permute.xlu0 0
    %886 = vperm.xlu0 %885, %v876
    %v887 = vpop.permute.xlu0 %886
    %890 = vset.pattern.permute.xlu0 0
    %891 = vperm.xlu0 %890, %v877
    %v892 = vpop.permute.xlu0 %891
    %895 = vset.pattern.permute.xlu0 0
    %896 = vperm.xlu0 %895, %v878
    %v897 = vpop.permute.xlu0 %896
    %900 = vset.pattern.permute.xlu0 0
    %901 = vperm.xlu0 %900, %v879
    %v902 = vpop.permute.xlu0 %901
    %905 = vset.pattern.permute.xlu0 0
    %906 = vperm.xlu0 %905, %v880
    %v907 = vpop.permute.xlu0 %906
    %910 = vset.pattern.permute.xlu0 0
    %911 = vperm.xlu0 %910, %v881
    %v912 = vpop.permute.xlu0 %911
    %915 = vset.pattern.permute.xlu0 0
    %916 = vperm.xlu0 %915, %v882
    %v917 = vpop.permute.xlu0 %916
    %920 = vset.pattern.permute.xlu0 0
    %921 = vperm.xlu0 %920, %v883
    %v922 = vpop.permute.xlu0 %921
    %vm924 = vcmask 523264
    %v926 = vsel %vm924, %v868, 0
    %v929 = vsel %vm924, %v869, 0
    %v932 = vsel %vm924, %v870, 0
    %v935 = vsel %vm924, %v871, 0
    %v938 = vsel %vm924, %v872, 0
    %v941 = vsel %vm924, %v873, 0
    %v944 = vsel %vm924, %v874, 0
    %v947 = vsel %vm924, %v875, 0
    %949 = vmatprep.subr.mxu0 0.0
    %v950 = vand.u32 %v860, 4294901760
    %951 = vmatpush1.msra.mxu0 %v950
    %952 = vmatprep.subr.mxu0 0.0
    %v953 = vand.u32 %v861, 4294901760
    %954 = vmatpush1.msra.mxu0 %v953
    %955 = vmatprep.subr.mxu0 0.0
    %v956 = vand.u32 %v862, 4294901760
    %957 = vmatpush1.msra.mxu0 %v956
    %958 = vmatprep.subr.mxu0 0.0
    %v959 = vand.u32 %v863, 4294901760
    %960 = vmatpush1.msra.mxu0 %v959
    %961 = vmatprep.subr.mxu0 0.0
    %v962 = vand.u32 %v864, 4294901760
    %963 = vmatpush1.msra.mxu0 %v962
    %964 = vmatprep.subr.mxu0 0.0
    %v965 = vand.u32 %v865, 4294901760
    %966 = vmatpush1.msra.mxu0 %v965
    %967 = vmatprep.subr.mxu0 0.0
    %v968 = vand.u32 %v866, 4294901760
    %969 = vmatpush1.msra.mxu0 %v968
    %970 = vmatprep.subr.mxu0 0.0
    %v971 = vand.u32 %v867, 4294901760
    %972 = vmatpush1.msra.mxu0 %v971
    %973 = vmatprep.subr.mxu0 0.0
    %974 = vmatpush1.msra.mxu0 0.0
    %975 = vmatprep.subr.mxu0 0.0
    %976 = vmatpush1.msra.mxu0 0.0
    %977 = vmatprep.subr.mxu0 0.0
    %978 = vmatpush1.msra.mxu0 0.0
    %979 = vmatprep.subr.mxu0 0.0
    %980 = vmatpush1.msra.mxu0 0.0
    %981 = vmatprep.subr.mxu0 0.0
    %982 = vmatpush1.msra.mxu0 0.0
    %983 = vmatprep.subr.mxu0 0.0
    %984 = vmatpush1.msra.mxu0 0.0
    %985 = vmatprep.subr.mxu0 0.0
    %986 = vmatpush1.msra.mxu0 0.0
    %987 = vmatprep.subr.mxu0 0.0
    %988 = vmatpush1.msra.mxu0 0.0
    %989 = vmatprep.subr.mxu0 0.0
    %990 = vmatpush1.msra.mxu0 0.0
    %991 = vmatprep.subr.mxu0 0.0
    %992 = vmatpush1.msra.mxu0 0.0
    %993 = vmatprep.subr.mxu0 0.0
    %994 = vmatpush1.msra.mxu0 0.0
    %995 = vmatprep.subr.mxu0 0.0
    %996 = vmatpush1.msra.mxu0 0.0
    %997 = vmatprep.subr.mxu0 0.0
    %998 = vmatpush1.msra.mxu0 0.0
    %999 = vmatprep.subr.mxu0 0.0
    %1000 = vmatpush1.msra.mxu0 0.0
    %1001 = vmatprep.subr.mxu0 0.0
    %1002 = vmatpush1.msra.mxu0 0.0
    %1003 = vmatprep.subr.mxu0 0.0
    %1004 = vmatpush1.msra.mxu0 0.0
    %1005 = vmatprep.subr.mxu0 0.0
    %1006 = vmatpush1.msra.mxu0 0.0
    %1007 = vmatprep.subr.mxu0 0.0
    %1008 = vmatpush1.msra.mxu0 0.0
    %1009 = vmatprep.subr.mxu0 0.0
    %1010 = vmatpush1.msra.mxu0 0.0
    %1011 = vmatprep.subr.mxu0 0.0
    %1012 = vmatpush1.msra.mxu0 0.0
    %1013 = vmatprep.subr.mxu0 0.0
    %1014 = vmatpush1.msra.mxu0 0.0
    %1015 = vmatprep.subr.mxu0 0.0
    %1016 = vmatpush1.msra.mxu0 0.0
    %1017 = vmatprep.subr.mxu0 0.0
    %1018 = vmatpush1.msra.mxu0 0.0
    %1019 = vmatprep.subr.mxu0 0.0
    %1020 = vmatpush1.msra.mxu0 0.0
    %1021 = vmatprep.mubr.f32.mxu0 0.0
    %v1022 = vand.u32 %v926, 4294901760
    %v1023 = vsub.f32 %v926, %v1022
    %v1024 = vand.u32 %v1023, 4294901760
    %v1025 = vsub.f32 %v1023, %v1024
    %v1026 = vand.u32 %v1025, 4294901760
    %1027 = vmatmul.mubr.f32.gmra.mrb[0].mxu0 %v1026
    %v1028 = vpop.f32.mrb[0].mxu0
    %v1029 = vadd.f32 %v887, %v1028
    %v1030 = vpop.f32.mrb[0].mxu0
    %1031 = vmatprep.mubr.f32.mxu0 0.0
    %v1032 = vand.u32 %v929, 4294901760
    %v1033 = vsub.f32 %v929, %v1032
    %v1034 = vand.u32 %v1033, 4294901760
    %v1035 = vsub.f32 %v1033, %v1034
    %v1036 = vand.u32 %v1035, 4294901760
    %1037 = vmatmul.mubr.f32.gmra.mrb[0].mxu0 %v1036
    %v1038 = vpop.f32.mrb[0].mxu0
    %v1039 = vadd.f32 %v892, %v1038
    %v1040 = vpop.f32.mrb[0].mxu0
    %1041 = vmatprep.mubr.f32.mxu0 0.0
    %v1042 = vand.u32 %v932, 4294901760
    %v1043 = vsub.f32 %v932, %v1042
    %v1044 = vand.u32 %v1043, 4294901760
    %v1045 = vsub.f32 %v1043, %v1044
    %v1046 = vand.u32 %v1045, 4294901760
    %1047 = vmatmul.mubr.f32.gmra.mrb[0].mxu0 %v1046
    %v1048 = vpop.f32.mrb[0].mxu0
    %v1049 = vadd.f32 %v897, %v1048
    %v1050 = vpop.f32.mrb[0].mxu0
    %1051 = vmatprep.mubr.f32.mxu0 0.0
    %v1052 = vand.u32 %v935, 4294901760
    %v1053 = vsub.f32 %v935, %v1052
    %v1054 = vand.u32 %v1053, 4294901760
    %v1055 = vsub.f32 %v1053, %v1054
    %v1056 = vand.u32 %v1055, 4294901760
    %1057 = vmatmul.mubr.f32.gmra.mrb[0].mxu0 %v1056
    %v1058 = vpop.f32.mrb[0].mxu0
    %v1059 = vadd.f32 %v902, %v1058
    %v1060 = vpop.f32.mrb[0].mxu0
    %1061 = vmatprep.mubr.f32.mxu0 0.0
    %v1062 = vand.u32 %v938, 4294901760
    %v1063 = vsub.f32 %v938, %v1062
    %v1064 = vand.u32 %v1063, 4294901760
    %v1065 = vsub.f32 %v1063, %v1064
    %v1066 = vand.u32 %v1065, 4294901760
    %1067 = vmatmul.mubr.f32.gmra.mrb[0].mxu0 %v1066
    %v1068 = vpop.f32.mrb[0].mxu0
    %v1069 = vadd.f32 %v907, %v1068
    %v1070 = vpop.f32.mrb[0].mxu0
    %1071 = vmatprep.mubr.f32.mxu0 0.0
    %v1072 = vand.u32 %v941, 4294901760
    %v1073 = vsub.f32 %v941, %v1072
    %v1074 = vand.u32 %v1073, 4294901760
    %v1075 = vsub.f32 %v1073, %v1074
    %v1076 = vand.u32 %v1075, 4294901760
    %1077 = vmatmul.mubr.f32.gmra.mrb[0].mxu0 %v1076
    %v1078 = vpop.f32.mrb[0].mxu0
    %v1079 = vadd.f32 %v912, %v1078
    %v1080 = vpop.f32.mrb[0].mxu0
    %1081 = vmatprep.mubr.f32.mxu0 0.0
    %v1082 = vand.u32 %v944, 4294901760
    %v1083 = vsub.f32 %v944, %v1082
    %v1084 = vand.u32 %v1083, 4294901760
    %v1085 = vsub.f32 %v1083, %v1084
    %v1086 = vand.u32 %v1085, 4294901760
    %1087 = vmatmul.mubr.f32.gmra.mrb[0].mxu0 %v1086
    %v1088 = vpop.f32.mrb[0].mxu0
    %v1089 = vadd.f32 %v917, %v1088
    %v1090 = vpop.f32.mrb[0].mxu0
    %1091 = vmatprep.mubr.f32.mxu0 0.0
    %v1092 = vand.u32 %v947, 4294901760
    %v1093 = vsub.f32 %v947, %v1092
    %v1094 = vand.u32 %v1093, 4294901760
    %v1095 = vsub.f32 %v1093, %v1094
    %v1096 = vand.u32 %v1095, 4294901760
    %1097 = vmatmul.mubr.f32.gmra.mrb[0].mxu0 %v1096
    %v1098 = vpop.f32.mrb[0].mxu0
    %v1099 = vadd.f32 %v922, %v1098
    %v1100 = vpop.f32.mrb[0].mxu0
    %1101 = vdwg.mxu0
    %1102 = vmatprep.subr.mxu0 0.0
    %v1103 = vand.u32 %v860, 4294901760
    %v1104 = vsub.f32 %v860, %v1103
    %v1105 = vand.u32 %v1104, 4294901760
    %v1106 = vsub.f32 %v1104, %v1105
    %v1107 = vand.u32 %v1106, 4294901760
    %1108 = vmatpush1.msra.mxu0 %v1107
    %1109 = vmatprep.subr.mxu0 0.0
    %v1110 = vand.u32 %v861, 4294901760
    %v1111 = vsub.f32 %v861, %v1110
    %v1112 = vand.u32 %v1111, 4294901760
    %v1113 = vsub.f32 %v1111, %v1112
    %v1114 = vand.u32 %v1113, 4294901760
    %1115 = vmatpush1.msra.mxu0 %v1114
    %1116 = vmatprep.subr.mxu0 0.0
    %v1117 = vand.u32 %v862, 4294901760
    %v1118 = vsub.f32 %v862, %v1117
    %v1119 = vand.u32 %v1118, 4294901760
    %v1120 = vsub.f32 %v1118, %v1119
    %v1121 = vand.u32 %v1120, 4294901760
    %1122 = vmatpush1.msra.mxu0 %v1121
    %1123 = vmatprep.subr.mxu0 0.0
    %v1124 = vand.u32 %v863, 4294901760
    %v1125 = vsub.f32 %v863, %v1124
    %v1126 = vand.u32 %v1125, 4294901760
    %v1127 = vsub.f32 %v1125, %v1126
    %v1128 = vand.u32 %v1127, 4294901760
    %1129 = vmatpush1.msra.mxu0 %v1128
    %1130 = vmatprep.subr.mxu0 0.0
    %v1131 = vand.u32 %v864, 4294901760
    %v1132 = vsub.f32 %v864, %v1131
    %v1133 = vand.u32 %v1132, 4294901760
    %v1134 = vsub.f32 %v1132, %v1133
    %v1135 = vand.u32 %v1134, 4294901760
    %1136 = vmatpush1.msra.mxu0 %v1135
    %1137 = vmatprep.subr.mxu0 0.0
    %v1138 = vand.u32 %v865, 4294901760
    %v1139 = vsub.f32 %v865, %v1138
    %v1140 = vand.u32 %v1139, 4294901760
    %v1141 = vsub.f32 %v1139, %v1140
    %v1142 = vand.u32 %v1141, 4294901760
    %1143 = vmatpush1.msra.mxu0 %v1142
    %1144 = vmatprep.subr.mxu0 0.0
    %v1145 = vand.u32 %v866, 4294901760
    %v1146 = vsub.f32 %v866, %v1145
    %v1147 = vand.u32 %v1146, 4294901760
    %v1148 = vsub.f32 %v1146, %v1147
    %v1149 = vand.u32 %v1148, 4294901760
    %1150 = vmatpush1.msra.mxu0 %v1149
    %1151 = vmatprep.subr.mxu0 0.0
    %v1152 = vand.u32 %v867, 4294901760
    %v1153 = vsub.f32 %v867, %v1152
    %v1154 = vand.u32 %v1153, 4294901760
    %v1155 = vsub.f32 %v1153, %v1154
    %v1156 = vand.u32 %v1155, 4294901760
    %1157 = vmatpush1.msra.mxu0 %v1156
    %1158 = vmatprep.subr.mxu0 0.0
    %1159 = vmatpush1.msra.mxu0 0.0
    %1160 = vmatprep.subr.mxu0 0.0
    %1161 = vmatpush1.msra.mxu0 0.0
    %1162 = vmatprep.subr.mxu0 0.0
    %1163 = vmatpush1.msra.mxu0 0.0
    %1164 = vmatprep.subr.mxu0 0.0
    %1165 = vmatpush1.msra.mxu0 0.0
    %1166 = vmatprep.subr.mxu0 0.0
    %1167 = vmatpush1.msra.mxu0 0.0
    %1168 = vmatprep.subr.mxu0 0.0
    %1169 = vmatpush1.msra.mxu0 0.0
    %1170 = vmatprep.subr.mxu0 0.0
    %1171 = vmatpush1.msra.mxu0 0.0
    %1172 = vmatprep.subr.mxu0 0.0
    %1173 = vmatpush1.msra.mxu0 0.0
    %1174 = vmatprep.subr.mxu0 0.0
    %1175 = vmatpush1.msra.mxu0 0.0
    %1176 = vmatprep.subr.mxu0 0.0
    %1177 = vmatpush1.msra.mxu0 0.0
    %1178 = vmatprep.subr.mxu0 0.0
    %1179 = vmatpush1.msra.mxu0 0.0
    %1180 = vmatprep.subr.mxu0 0.0
    %1181 = vmatpush1.msra.mxu0 0.0
    %1182 = vmatprep.subr.mxu0 0.0
    %1183 = vmatpush1.msra.mxu0 0.0
    %1184 = vmatprep.subr.mxu0 0.0
    %1185 = vmatpush1.msra.mxu0 0.0
    %1186 = vmatprep.subr.mxu0 0.0
    %1187 = vmatpush1.msra.mxu0 0.0
    %1188 = vmatprep.subr.mxu0 0.0
    %1189 = vmatpush1.msra.mxu0 0.0
    %1190 = vmatprep.subr.mxu0 0.0
    %1191 = vmatpush1.msra.mxu0 0.0
    %1192 = vmatprep.subr.mxu0 0.0
    %1193 = vmatpush1.msra.mxu0 0.0
    %1194 = vmatprep.subr.mxu0 0.0
    %1195 = vmatpush1.msra.mxu0 0.0
    %1196 = vmatprep.subr.mxu0 0.0
    %1197 = vmatpush1.msra.mxu0 0.0
    %1198 = vmatprep.subr.mxu0 0.0
    %1199 = vmatpush1.msra.mxu0 0.0
    %1200 = vmatprep.subr.mxu0 0.0
    %1201 = vmatpush1.msra.mxu0 0.0
    %1202 = vmatprep.subr.mxu0 0.0
    %1203 = vmatpush1.msra.mxu0 0.0
    %1204 = vmatprep.subr.mxu0 0.0
    %1205 = vmatpush1.msra.mxu0 0.0
    %1206 = vmatprep.mubr.f32.mxu0 0.0
    %v1207 = vand.u32 %v926, 4294901760
    %1208 = vmatmul.mubr.f32.gmra.mrb[0].mxu0 %v1207
    %v1209 = vpop.f32.mrb[0].mxu0
    %v1210 = vadd.f32 %v1029, %v1209
    %v1211 = vpop.f32.mrb[0].mxu0
    %1212 = vmatprep.mubr.f32.mxu0 0.0
    %v1213 = vand.u32 %v929, 4294901760
    %1214 = vmatmul.mubr.f32.gmra.mrb[0].mxu0 %v1213
    %v1215 = vpop.f32.mrb[0].mxu0
    %v1216 = vadd.f32 %v1039, %v1215
    %v1217 = vpop.f32.mrb[0].mxu0
    %1218 = vmatprep.mubr.f32.mxu0 0.0
    %v1219 = vand.u32 %v932, 4294901760
    %1220 = vmatmul.mubr.f32.gmra.mrb[0].mxu0 %v1219
    %v1221 = vpop.f32.mrb[0].mxu0
    %v1222 = vadd.f32 %v1049, %v1221
    %v1223 = vpop.f32.mrb[0].mxu0
    %1224 = vmatprep.mubr.f32.mxu0 0.0
    %v1225 = vand.u32 %v935, 4294901760
    %1226 = vmatmul.mubr.f32.gmra.mrb[0].mxu0 %v1225
    %v1227 = vpop.f32.mrb[0].mxu0
    %v1228 = vadd.f32 %v1059, %v1227
    %v1229 = vpop.f32.mrb[0].mxu0
    %1230 = vmatprep.mubr.f32.mxu0 0.0
    %v1231 = vand.u32 %v938, 4294901760
    %1232 = vmatmul.mubr.f32.gmra.mrb[0].mxu0 %v1231
    %v1233 = vpop.f32.mrb[0].mxu0
    %v1234 = vadd.f32 %v1069, %v1233
    %v1235 = vpop.f32.mrb[0].mxu0
    %1236 = vmatprep.mubr.f32.mxu0 0.0
    %v1237 = vand.u32 %v941, 4294901760
    %1238 = vmatmul.mubr.f32.gmra.mrb[0].mxu0 %v1237
    %v1239 = vpop.f32.mrb[0].mxu0
    %v1240 = vadd.f32 %v1079, %v1239
    %v1241 = vpop.f32.mrb[0].mxu0
    %1242 = vmatprep.mubr.f32.mxu0 0.0
    %v1243 = vand.u32 %v944, 4294901760
    %1244 = vmatmul.mubr.f32.gmra.mrb[0].mxu0 %v1243
    %v1245 = vpop.f32.mrb[0].mxu0
    %v1246 = vadd.f32 %v1089, %v1245
    %v1247 = vpop.f32.mrb[0].mxu0
    %1248 = vmatprep.mubr.f32.mxu0 0.0
    %v1249 = vand.u32 %v947, 4294901760
    %1250 = vmatmul.mubr.f32.gmra.mrb[0].mxu0 %v1249
    %v1251 = vpop.f32.mrb[0].mxu0
    %v1252 = vadd.f32 %v1099, %v1251
    %v1253 = vpop.f32.mrb[0].mxu0
    %1254 = vdwg.mxu0
    %1255 = vmatprep.subr.mxu0 0.0
    %v1256 = vand.u32 %v860, 4294901760
    %v1257 = vsub.f32 %v860, %v1256
    %1258 = vmatpush1.msra.mxu0 %v1257
    %1259 = vmatprep.subr.mxu0 0.0
    %v1260 = vand.u32 %v861, 4294901760
    %v1261 = vsub.f32 %v861, %v1260
    %1262 = vmatpush1.msra.mxu0 %v1261
    %1263 = vmatprep.subr.mxu0 0.0
    %v1264 = vand.u32 %v862, 4294901760
    %v1265 = vsub.f32 %v862, %v1264
    %1266 = vmatpush1.msra.mxu0 %v1265
    %1267 = vmatprep.subr.mxu0 0.0
    %v1268 = vand.u32 %v863, 4294901760
    %v1269 = vsub.f32 %v863, %v1268
    %1270 = vmatpush1.msra.mxu0 %v1269
    %1271 = vmatprep.subr.mxu0 0.0
    %v1272 = vand.u32 %v864, 4294901760
    %v1273 = vsub.f32 %v864, %v1272
    %1274 = vmatpush1.msra.mxu0 %v1273
    %1275 = vmatprep.subr.mxu0 0.0
    %v1276 = vand.u32 %v865, 4294901760
    %v1277 = vsub.f32 %v865, %v1276
    %1278 = vmatpush1.msra.mxu0 %v1277
    %1279 = vmatprep.subr.mxu0 0.0
    %v1280 = vand.u32 %v866, 4294901760
    %v1281 = vsub.f32 %v866, %v1280
    %1282 = vmatpush1.msra.mxu0 %v1281
    %1283 = vmatprep.subr.mxu0 0.0
    %v1284 = vand.u32 %v867, 4294901760
    %v1285 = vsub.f32 %v867, %v1284
    %1286 = vmatpush1.msra.mxu0 %v1285
    %1287 = vmatprep.subr.mxu0 0.0
    %1288 = vmatpush1.msra.mxu0 0.0
    %1289 = vmatprep.subr.mxu0 0.0
    %1290 = vmatpush1.msra.mxu0 0.0
    %1291 = vmatprep.subr.mxu0 0.0
    %1292 = vmatpush1.msra.mxu0 0.0
    %1293 = vmatprep.subr.mxu0 0.0
    %1294 = vmatpush1.msra.mxu0 0.0
    %1295 = vmatprep.subr.mxu0 0.0
    %1296 = vmatpush1.msra.mxu0 0.0
    %1297 = vmatprep.subr.mxu0 0.0
    %1298 = vmatpush1.msra.mxu0 0.0
    %1299 = vmatprep.subr.mxu0 0.0
    %1300 = vmatpush1.msra.mxu0 0.0
    %1301 = vmatprep.subr.mxu0 0.0
    %1302 = vmatpush1.msra.mxu0 0.0
    %1303 = vmatprep.subr.mxu0 0.0
    %1304 = vmatpush1.msra.mxu0 0.0
    %1305 = vmatprep.subr.mxu0 0.0
    %1306 = vmatpush1.msra.mxu0 0.0
    %1307 = vmatprep.subr.mxu0 0.0
    %1308 = vmatpush1.msra.mxu0 0.0
    %1309 = vmatprep.subr.mxu0 0.0
    %1310 = vmatpush1.msra.mxu0 0.0
    %1311 = vmatprep.subr.mxu0 0.0
    %1312 = vmatpush1.msra.mxu0 0.0
    %1313 = vmatprep.subr.mxu0 0.0
    %1314 = vmatpush1.msra.mxu0 0.0
    %1315 = vmatprep.subr.mxu0 0.0
    %1316 = vmatpush1.msra.mxu0 0.0
    %1317 = vmatprep.subr.mxu0 0.0
    %1318 = vmatpush1.msra.mxu0 0.0
    %1319 = vmatprep.subr.mxu0 0.0
    %1320 = vmatpush1.msra.mxu0 0.0
    %1321 = vmatprep.subr.mxu0 0.0
    %1322 = vmatpush1.msra.mxu0 0.0
    %1323 = vmatprep.subr.mxu0 0.0
    %1324 = vmatpush1.msra.mxu0 0.0
    %1325 = vmatprep.subr.mxu0 0.0
    %1326 = vmatpush1.msra.mxu0 0.0
    %1327 = vmatprep.subr.mxu0 0.0
    %1328 = vmatpush1.msra.mxu0 0.0
    %1329 = vmatprep.subr.mxu0 0.0
    %1330 = vmatpush1.msra.mxu0 0.0
    %1331 = vmatprep.subr.mxu0 0.0
    %1332 = vmatpush1.msra.mxu0 0.0
    %1333 = vmatprep.subr.mxu0 0.0
    %1334 = vmatpush1.msra.mxu0 0.0
    %1335 = vmatprep.mubr.f32.mxu0 0.0
    %v1336 = vand.u32 %v926, 4294901760
    %v1337 = vsub.f32 %v926, %v1336
    %1338 = vmatmul.mubr.f32.gmra.mrb[0].mxu0 %v1337
    %v1339 = vpop.f32.mrb[0].mxu0
    %v1340 = vadd.f32 %v1210, %v1339
    %v1341 = vpop.f32.mrb[0].mxu0
    %1342 = vmatprep.mubr.f32.mxu0 0.0
    %v1343 = vand.u32 %v929, 4294901760
    %v1344 = vsub.f32 %v929, %v1343
    %1345 = vmatmul.mubr.f32.gmra.mrb[0].mxu0 %v1344
    %v1346 = vpop.f32.mrb[0].mxu0
    %v1347 = vadd.f32 %v1216, %v1346
    %v1348 = vpop.f32.mrb[0].mxu0
    %1349 = vmatprep.mubr.f32.mxu0 0.0
    %v1350 = vand.u32 %v932, 4294901760
    %v1351 = vsub.f32 %v932, %v1350
    %1352 = vmatmul.mubr.f32.gmra.mrb[0].mxu0 %v1351
    %v1353 = vpop.f32.mrb[0].mxu0
    %v1354 = vadd.f32 %v1222, %v1353
    %v1355 = vpop.f32.mrb[0].mxu0
    %1356 = vmatprep.mubr.f32.mxu0 0.0
    %v1357 = vand.u32 %v935, 4294901760
    %v1358 = vsub.f32 %v935, %v1357
    %1359 = vmatmul.mubr.f32.gmra.mrb[0].mxu0 %v1358
    %v1360 = vpop.f32.mrb[0].mxu0
    %v1361 = vadd.f32 %v1228, %v1360
    %v1362 = vpop.f32.mrb[0].mxu0
    %1363 = vmatprep.mubr.f32.mxu0 0.0
    %v1364 = vand.u32 %v938, 4294901760
    %v1365 = vsub.f32 %v938, %v1364
    %1366 = vmatmul.mubr.f32.gmra.mrb[0].mxu0 %v1365
    %v1367 = vpop.f32.mrb[0].mxu0
    %v1368 = vadd.f32 %v1234, %v1367
    %v1369 = vpop.f32.mrb[0].mxu0
    %1370 = vmatprep.mubr.f32.mxu0 0.0
    %v1371 = vand.u32 %v941, 4294901760
    %v1372 = vsub.f32 %v941, %v1371
    %1373 = vmatmul.mubr.f32.gmra.mrb[0].mxu0 %v1372
    %v1374 = vpop.f32.mrb[0].mxu0
    %v1375 = vadd.f32 %v1240, %v1374
    %v1376 = vpop.f32.mrb[0].mxu0
    %1377 = vmatprep.mubr.f32.mxu0 0.0
    %v1378 = vand.u32 %v944, 4294901760
    %v1379 = vsub.f32 %v944, %v1378
    %1380 = vmatmul.mubr.f32.gmra.mrb[0].mxu0 %v1379
    %v1381 = vpop.f32.mrb[0].mxu0
    %v1382 = vadd.f32 %v1246, %v1381
    %v1383 = vpop.f32.mrb[0].mxu0
    %1384 = vmatprep.mubr.f32.mxu0 0.0
    %v1385 = vand.u32 %v947, 4294901760
    %v1386 = vsub.f32 %v947, %v1385
    %1387 = vmatmul.mubr.f32.gmra.mrb[0].mxu0 %v1386
    %v1388 = vpop.f32.mrb[0].mxu0
    %v1389 = vadd.f32 %v1252, %v1388
    %v1390 = vpop.f32.mrb[0].mxu0
    %1391 = vdwg.mxu0
    %1392 = vmatprep.subr.mxu0 0.0
    %v1393 = vand.u32 %v860, 4294901760
    %1394 = vmatpush1.msra.mxu0 %v1393
    %1395 = vmatprep.subr.mxu0 0.0
    %v1396 = vand.u32 %v861, 4294901760
    %1397 = vmatpush1.msra.mxu0 %v1396
    %1398 = vmatprep.subr.mxu0 0.0
    %v1399 = vand.u32 %v862, 4294901760
    %1400 = vmatpush1.msra.mxu0 %v1399
    %1401 = vmatprep.subr.mxu0 0.0
    %v1402 = vand.u32 %v863, 4294901760
    %1403 = vmatpush1.msra.mxu0 %v1402
    %1404 = vmatprep.subr.mxu0 0.0
    %v1405 = vand.u32 %v864, 4294901760
    %1406 = vmatpush1.msra.mxu0 %v1405
    %1407 = vmatprep.subr.mxu0 0.0
    %v1408 = vand.u32 %v865, 4294901760
    %1409 = vmatpush1.msra.mxu0 %v1408
    %1410 = vmatprep.subr.mxu0 0.0
    %v1411 = vand.u32 %v866, 4294901760
    %1412 = vmatpush1.msra.mxu0 %v1411
    %1413 = vmatprep.subr.mxu0 0.0
    %v1414 = vand.u32 %v867, 4294901760
    %1415 = vmatpush1.msra.mxu0 %v1414
    %1416 = vmatprep.subr.mxu0 0.0
    %1417 = vmatpush1.msra.mxu0 0.0
    %1418 = vmatprep.subr.mxu0 0.0
    %1419 = vmatpush1.msra.mxu0 0.0
    %1420 = vmatprep.subr.mxu0 0.0
    %1421 = vmatpush1.msra.mxu0 0.0
    %1422 = vmatprep.subr.mxu0 0.0
    %1423 = vmatpush1.msra.mxu0 0.0
    %1424 = vmatprep.subr.mxu0 0.0
    %1425 = vmatpush1.msra.mxu0 0.0
    %1426 = vmatprep.subr.mxu0 0.0
    %1427 = vmatpush1.msra.mxu0 0.0
    %1428 = vmatprep.subr.mxu0 0.0
    %1429 = vmatpush1.msra.mxu0 0.0
    %1430 = vmatprep.subr.mxu0 0.0
    %1431 = vmatpush1.msra.mxu0 0.0
    %1432 = vmatprep.subr.mxu0 0.0
    %1433 = vmatpush1.msra.mxu0 0.0
    %1434 = vmatprep.subr.mxu0 0.0
    %1435 = vmatpush1.msra.mxu0 0.0
    %1436 = vmatprep.subr.mxu0 0.0
    %1437 = vmatpush1.msra.mxu0 0.0
    %1438 = vmatprep.subr.mxu0 0.0
    %1439 = vmatpush1.msra.mxu0 0.0
    %1440 = vmatprep.subr.mxu0 0.0
    %1441 = vmatpush1.msra.mxu0 0.0
    %1442 = vmatprep.subr.mxu0 0.0
    %1443 = vmatpush1.msra.mxu0 0.0
    %1444 = vmatprep.subr.mxu0 0.0
    %1445 = vmatpush1.msra.mxu0 0.0
    %1446 = vmatprep.subr.mxu0 0.0
    %1447 = vmatpush1.msra.mxu0 0.0
    %1448 = vmatprep.subr.mxu0 0.0
    %1449 = vmatpush1.msra.mxu0 0.0
    %1450 = vmatprep.subr.mxu0 0.0
    %1451 = vmatpush1.msra.mxu0 0.0
    %1452 = vmatprep.subr.mxu0 0.0
    %1453 = vmatpush1.msra.mxu0 0.0
    %1454 = vmatprep.subr.mxu0 0.0
    %1455 = vmatpush1.msra.mxu0 0.0
    %1456 = vmatprep.subr.mxu0 0.0
    %1457 = vmatpush1.msra.mxu0 0.0
    %1458 = vmatprep.subr.mxu0 0.0
    %1459 = vmatpush1.msra.mxu0 0.0
    %1460 = vmatprep.subr.mxu0 0.0
    %1461 = vmatpush1.msra.mxu0 0.0
    %1462 = vmatprep.subr.mxu0 0.0
    %1463 = vmatpush1.msra.mxu0 0.0
    %1464 = vmatprep.mubr.f32.mxu0 0.0
    %v1465 = vand.u32 %v926, 4294901760
    %v1466 = vsub.f32 %v926, %v1465
    %v1467 = vand.u32 %v1466, 4294901760
    %1468 = vmatmul.mubr.f32.gmra.mrb[0].mxu0 %v1467
    %v1469 = vpop.f32.mrb[0].mxu0
    %v1470 = vadd.f32 %v1340, %v1469
    %v1471 = vpop.f32.mrb[0].mxu0
    %1472 = vmatprep.mubr.f32.mxu0 0.0
    %v1473 = vand.u32 %v929, 4294901760
    %v1474 = vsub.f32 %v929, %v1473
    %v1475 = vand.u32 %v1474, 4294901760
    %1476 = vmatmul.mubr.f32.gmra.mrb[0].mxu0 %v1475
    %v1477 = vpop.f32.mrb[0].mxu0
    %v1478 = vadd.f32 %v1347, %v1477
    %v1479 = vpop.f32.mrb[0].mxu0
    %1480 = vmatprep.mubr.f32.mxu0 0.0
    %v1481 = vand.u32 %v932, 4294901760
    %v1482 = vsub.f32 %v932, %v1481
    %v1483 = vand.u32 %v1482, 4294901760
    %1484 = vmatmul.mubr.f32.gmra.mrb[0].mxu0 %v1483
    %v1485 = vpop.f32.mrb[0].mxu0
    %v1486 = vadd.f32 %v1354, %v1485
    %v1487 = vpop.f32.mrb[0].mxu0
    %1488 = vmatprep.mubr.f32.mxu0 0.0
    %v1489 = vand.u32 %v935, 4294901760
    %v1490 = vsub.f32 %v935, %v1489
    %v1491 = vand.u32 %v1490, 4294901760
    %1492 = vmatmul.mubr.f32.gmra.mrb[0].mxu0 %v1491
    %v1493 = vpop.f32.mrb[0].mxu0
    %v1494 = vadd.f32 %v1361, %v1493
    %v1495 = vpop.f32.mrb[0].mxu0
    %1496 = vmatprep.mubr.f32.mxu0 0.0
    %v1497 = vand.u32 %v938, 4294901760
    %v1498 = vsub.f32 %v938, %v1497
    %v1499 = vand.u32 %v1498, 4294901760
    %1500 = vmatmul.mubr.f32.gmra.mrb[0].mxu0 %v1499
    %v1501 = vpop.f32.mrb[0].mxu0
    %v1502 = vadd.f32 %v1368, %v1501
    %v1503 = vpop.f32.mrb[0].mxu0
    %1504 = vmatprep.mubr.f32.mxu0 0.0
    %v1505 = vand.u32 %v941, 4294901760
    %v1506 = vsub.f32 %v941, %v1505
    %v1507 = vand.u32 %v1506, 4294901760
    %1508 = vmatmul.mubr.f32.gmra.mrb[0].mxu0 %v1507
    %v1509 = vpop.f32.mrb[0].mxu0
    %v1510 = vadd.f32 %v1375, %v1509
    %v1511 = vpop.f32.mrb[0].mxu0
    %1512 = vmatprep.mubr.f32.mxu0 0.0
    %v1513 = vand.u32 %v944, 4294901760
    %v1514 = vsub.f32 %v944, %v1513
    %v1515 = vand.u32 %v1514, 4294901760
    %1516 = vmatmul.mubr.f32.gmra.mrb[0].mxu0 %v1515
    %v1517 = vpop.f32.mrb[0].mxu0
    %v1518 = vadd.f32 %v1382, %v1517
    %v1519 = vpop.f32.mrb[0].mxu0
    %1520 = vmatprep.mubr.f32.mxu0 0.0
    %v1521 = vand.u32 %v947, 4294901760
    %v1522 = vsub.f32 %v947, %v1521
    %v1523 = vand.u32 %v1522, 4294901760
    %1524 = vmatmul.mubr.f32.gmra.mrb[0].mxu0 %v1523
    %v1525 = vpop.f32.mrb[0].mxu0
    %v1526 = vadd.f32 %v1389, %v1525
    %v1527 = vpop.f32.mrb[0].mxu0
    %1528 = vdwg.mxu0
    %1529 = vmatprep.subr.mxu0 0.0
    %v1530 = vand.u32 %v860, 4294901760
    %v1531 = vsub.f32 %v860, %v1530
    %v1532 = vand.u32 %v1531, 4294901760
    %1533 = vmatpush1.msra.mxu0 %v1532
    %1534 = vmatprep.subr.mxu0 0.0
    %v1535 = vand.u32 %v861, 4294901760
    %v1536 = vsub.f32 %v861, %v1535
    %v1537 = vand.u32 %v1536, 4294901760
    %1538 = vmatpush1.msra.mxu0 %v1537
    %1539 = vmatprep.subr.mxu0 0.0
    %v1540 = vand.u32 %v862, 4294901760
    %v1541 = vsub.f32 %v862, %v1540
    %v1542 = vand.u32 %v1541, 4294901760
    %1543 = vmatpush1.msra.mxu0 %v1542
    %1544 = vmatprep.subr.mxu0 0.0
    %v1545 = vand.u32 %v863, 4294901760
    %v1546 = vsub.f32 %v863, %v1545
    %v1547 = vand.u32 %v1546, 4294901760
    %1548 = vmatpush1.msra.mxu0 %v1547
    %1549 = vmatprep.subr.mxu0 0.0
    %v1550 = vand.u32 %v864, 4294901760
    %v1551 = vsub.f32 %v864, %v1550
    %v1552 = vand.u32 %v1551, 4294901760
    %1553 = vmatpush1.msra.mxu0 %v1552
    %1554 = vmatprep.subr.mxu0 0.0
    %v1555 = vand.u32 %v865, 4294901760
    %v1556 = vsub.f32 %v865, %v1555
    %v1557 = vand.u32 %v1556, 4294901760
    %1558 = vmatpush1.msra.mxu0 %v1557
    %1559 = vmatprep.subr.mxu0 0.0
    %v1560 = vand.u32 %v866, 4294901760
    %v1561 = vsub.f32 %v866, %v1560
    %v1562 = vand.u32 %v1561, 4294901760
    %1563 = vmatpush1.msra.mxu0 %v1562
    %1564 = vmatprep.subr.mxu0 0.0
    %v1565 = vand.u32 %v867, 4294901760
    %v1566 = vsub.f32 %v867, %v1565
    %v1567 = vand.u32 %v1566, 4294901760
    %1568 = vmatpush1.msra.mxu0 %v1567
    %1569 = vmatprep.subr.mxu0 0.0
    %1570 = vmatpush1.msra.mxu0 0.0
    %1571 = vmatprep.subr.mxu0 0.0
    %1572 = vmatpush1.msra.mxu0 0.0
    %1573 = vmatprep.subr.mxu0 0.0
    %1574 = vmatpush1.msra.mxu0 0.0
    %1575 = vmatprep.subr.mxu0 0.0
    %1576 = vmatpush1.msra.mxu0 0.0
    %1577 = vmatprep.subr.mxu0 0.0
    %1578 = vmatpush1.msra.mxu0 0.0
    %1579 = vmatprep.subr.mxu0 0.0
    %1580 = vmatpush1.msra.mxu0 0.0
    %1581 = vmatprep.subr.mxu0 0.0
    %1582 = vmatpush1.msra.mxu0 0.0
    %1583 = vmatprep.subr.mxu0 0.0
    %1584 = vmatpush1.msra.mxu0 0.0
    %1585 = vmatprep.subr.mxu0 0.0
    %1586 = vmatpush1.msra.mxu0 0.0
    %1587 = vmatprep.subr.mxu0 0.0
    %1588 = vmatpush1.msra.mxu0 0.0
    %1589 = vmatprep.subr.mxu0 0.0
    %1590 = vmatpush1.msra.mxu0 0.0
    %1591 = vmatprep.subr.mxu0 0.0
    %1592 = vmatpush1.msra.mxu0 0.0
    %1593 = vmatprep.subr.mxu0 0.0
    %1594 = vmatpush1.msra.mxu0 0.0
    %1595 = vmatprep.subr.mxu0 0.0
    %1596 = vmatpush1.msra.mxu0 0.0
    %1597 = vmatprep.subr.mxu0 0.0
    %1598 = vmatpush1.msra.mxu0 0.0
    %1599 = vmatprep.subr.mxu0 0.0
    %1600 = vmatpush1.msra.mxu0 0.0
    %1601 = vmatprep.subr.mxu0 0.0
    %1602 = vmatpush1.msra.mxu0 0.0
    %1603 = vmatprep.subr.mxu0 0.0
    %1604 = vmatpush1.msra.mxu0 0.0
    %1605 = vmatprep.subr.mxu0 0.0
    %1606 = vmatpush1.msra.mxu0 0.0
    %1607 = vmatprep.subr.mxu0 0.0
    %1608 = vmatpush1.msra.mxu0 0.0
    %1609 = vmatprep.subr.mxu0 0.0
    %1610 = vmatpush1.msra.mxu0 0.0
    %1611 = vmatprep.subr.mxu0 0.0
    %1612 = vmatpush1.msra.mxu0 0.0
    %1613 = vmatprep.subr.mxu0 0.0
    %1614 = vmatpush1.msra.mxu0 0.0
    %1615 = vmatprep.subr.mxu0 0.0
    %1616 = vmatpush1.msra.mxu0 0.0
    %1617 = vmatprep.mubr.f32.mxu0 0.0
    %v1618 = vand.u32 %v926, 4294901760
    %1619 = vmatmul.mubr.f32.gmra.mrb[0].mxu0 %v1618
    %v1620 = vpop.f32.mrb[0].mxu0
    %v1621 = vadd.f32 %v1470, %v1620
    %v1622 = vpop.f32.mrb[0].mxu0
    %1623 = vmatprep.mubr.f32.mxu0 0.0
    %v1624 = vand.u32 %v929, 4294901760
    %1625 = vmatmul.mubr.f32.gmra.mrb[0].mxu0 %v1624
    %v1626 = vpop.f32.mrb[0].mxu0
    %v1627 = vadd.f32 %v1478, %v1626
    %v1628 = vpop.f32.mrb[0].mxu0
    %1629 = vmatprep.mubr.f32.mxu0 0.0
    %v1630 = vand.u32 %v932, 4294901760
    %1631 = vmatmul.mubr.f32.gmra.mrb[0].mxu0 %v1630
    %v1632 = vpop.f32.mrb[0].mxu0
    %v1633 = vadd.f32 %v1486, %v1632
    %v1634 = vpop.f32.mrb[0].mxu0
    %1635 = vmatprep.mubr.f32.mxu0 0.0
    %v1636 = vand.u32 %v935, 4294901760
    %1637 = vmatmul.mubr.f32.gmra.mrb[0].mxu0 %v1636
    %v1638 = vpop.f32.mrb[0].mxu0
    %v1639 = vadd.f32 %v1494, %v1638
    %v1640 = vpop.f32.mrb[0].mxu0
    %1641 = vmatprep.mubr.f32.mxu0 0.0
    %v1642 = vand.u32 %v938, 4294901760
    %1643 = vmatmul.mubr.f32.gmra.mrb[0].mxu0 %v1642
    %v1644 = vpop.f32.mrb[0].mxu0
    %v1645 = vadd.f32 %v1502, %v1644
    %v1646 = vpop.f32.mrb[0].mxu0
    %1647 = vmatprep.mubr.f32.mxu0 0.0
    %v1648 = vand.u32 %v941, 4294901760
    %1649 = vmatmul.mubr.f32.gmra.mrb[0].mxu0 %v1648
    %v1650 = vpop.f32.mrb[0].mxu0
    %v1651 = vadd.f32 %v1510, %v1650
    %v1652 = vpop.f32.mrb[0].mxu0
    %1653 = vmatprep.mubr.f32.mxu0 0.0
    %v1654 = vand.u32 %v944, 4294901760
    %1655 = vmatmul.mubr.f32.gmra.mrb[0].mxu0 %v1654
    %v1656 = vpop.f32.mrb[0].mxu0
    %v1657 = vadd.f32 %v1518, %v1656
    %v1658 = vpop.f32.mrb[0].mxu0
    %1659 = vmatprep.mubr.f32.mxu0 0.0
    %v1660 = vand.u32 %v947, 4294901760
    %1661 = vmatmul.mubr.f32.gmra.mrb[0].mxu0 %v1660
    %v1662 = vpop.f32.mrb[0].mxu0
    %v1663 = vadd.f32 %v1526, %v1662
    %v1664 = vpop.f32.mrb[0].mxu0
    %1665 = vdwg.mxu0
    %1666 = vmatprep.subr.mxu0 0.0
    %v1667 = vand.u32 %v860, 4294901760
    %1668 = vmatpush1.msra.mxu0 %v1667
    %1669 = vmatprep.subr.mxu0 0.0
    %v1670 = vand.u32 %v861, 4294901760
    %1671 = vmatpush1.msra.mxu0 %v1670
    %1672 = vmatprep.subr.mxu0 0.0
    %v1673 = vand.u32 %v862, 4294901760
    %1674 = vmatpush1.msra.mxu0 %v1673
    %1675 = vmatprep.subr.mxu0 0.0
    %v1676 = vand.u32 %v863, 4294901760
    %1677 = vmatpush1.msra.mxu0 %v1676
    %1678 = vmatprep.subr.mxu0 0.0
    %v1679 = vand.u32 %v864, 4294901760
    %1680 = vmatpush1.msra.mxu0 %v1679
    %1681 = vmatprep.subr.mxu0 0.0
    %v1682 = vand.u32 %v865, 4294901760
    %1683 = vmatpush1.msra.mxu0 %v1682
    %1684 = vmatprep.subr.mxu0 0.0
    %v1685 = vand.u32 %v866, 4294901760
    %1686 = vmatpush1.msra.mxu0 %v1685
    %1687 = vmatprep.subr.mxu0 0.0
    %v1688 = vand.u32 %v867, 4294901760
    %1689 = vmatpush1.msra.mxu0 %v1688
    %1690 = vmatprep.subr.mxu0 0.0
    %1691 = vmatpush1.msra.mxu0 0.0
    %1692 = vmatprep.subr.mxu0 0.0
    %1693 = vmatpush1.msra.mxu0 0.0
    %1694 = vmatprep.subr.mxu0 0.0
    %1695 = vmatpush1.msra.mxu0 0.0
    %1696 = vmatprep.subr.mxu0 0.0
    %1697 = vmatpush1.msra.mxu0 0.0
    %1698 = vmatprep.subr.mxu0 0.0
    %1699 = vmatpush1.msra.mxu0 0.0
    %1700 = vmatprep.subr.mxu0 0.0
    %1701 = vmatpush1.msra.mxu0 0.0
    %1702 = vmatprep.subr.mxu0 0.0
    %1703 = vmatpush1.msra.mxu0 0.0
    %1704 = vmatprep.subr.mxu0 0.0
    %1705 = vmatpush1.msra.mxu0 0.0
    %1706 = vmatprep.subr.mxu0 0.0
    %1707 = vmatpush1.msra.mxu0 0.0
    %1708 = vmatprep.subr.mxu0 0.0
    %1709 = vmatpush1.msra.mxu0 0.0
    %1710 = vmatprep.subr.mxu0 0.0
    %1711 = vmatpush1.msra.mxu0 0.0
    %1712 = vmatprep.subr.mxu0 0.0
    %1713 = vmatpush1.msra.mxu0 0.0
    %1714 = vmatprep.subr.mxu0 0.0
    %1715 = vmatpush1.msra.mxu0 0.0
    %1716 = vmatprep.subr.mxu0 0.0
    %1717 = vmatpush1.msra.mxu0 0.0
    %1718 = vmatprep.subr.mxu0 0.0
    %1719 = vmatpush1.msra.mxu0 0.0
    %1720 = vmatprep.subr.mxu0 0.0
    %1721 = vmatpush1.msra.mxu0 0.0
    %1722 = vmatprep.subr.mxu0 0.0
    %1723 = vmatpush1.msra.mxu0 0.0
    %1724 = vmatprep.subr.mxu0 0.0
    %1725 = vmatpush1.msra.mxu0 0.0
    %1726 = vmatprep.subr.mxu0 0.0
    %1727 = vmatpush1.msra.mxu0 0.0
    %1728 = vmatprep.subr.mxu0 0.0
    %1729 = vmatpush1.msra.mxu0 0.0
    %1730 = vmatprep.subr.mxu0 0.0
    %1731 = vmatpush1.msra.mxu0 0.0
    %1732 = vmatprep.subr.mxu0 0.0
    %1733 = vmatpush1.msra.mxu0 0.0
    %1734 = vmatprep.subr.mxu0 0.0
    %1735 = vmatpush1.msra.mxu0 0.0
    %1736 = vmatprep.subr.mxu0 0.0
    %1737 = vmatpush1.msra.mxu0 0.0
    %1738 = vmatprep.mubr.f32.mxu0 0.0
    %v1739 = vand.u32 %v926, 4294901760
    %1740 = vmatmul.mubr.f32.gmra.mrb[0].mxu0 %v1739
    %v1741 = vpop.f32.mrb[0].mxu0
    %v1742 = vadd.f32 %v1621, %v1741
    %v1743 = vpop.f32.mrb[0].mxu0
    %1744 = vmatprep.mubr.f32.mxu0 0.0
    %v1745 = vand.u32 %v929, 4294901760
    %1746 = vmatmul.mubr.f32.gmra.mrb[0].mxu0 %v1745
    %v1747 = vpop.f32.mrb[0].mxu0
    %v1748 = vadd.f32 %v1627, %v1747
    %v1749 = vpop.f32.mrb[0].mxu0
    %1750 = vmatprep.mubr.f32.mxu0 0.0
    %v1751 = vand.u32 %v932, 4294901760
    %1752 = vmatmul.mubr.f32.gmra.mrb[0].mxu0 %v1751
    %v1753 = vpop.f32.mrb[0].mxu0
    %v1754 = vadd.f32 %v1633, %v1753
    %v1755 = vpop.f32.mrb[0].mxu0
    %1756 = vmatprep.mubr.f32.mxu0 0.0
    %v1757 = vand.u32 %v935, 4294901760
    %1758 = vmatmul.mubr.f32.gmra.mrb[0].mxu0 %v1757
    %v1759 = vpop.f32.mrb[0].mxu0
    %v1760 = vadd.f32 %v1639, %v1759
    %v1761 = vpop.f32.mrb[0].mxu0
    %1762 = vmatprep.mubr.f32.mxu0 0.0
    %v1763 = vand.u32 %v938, 4294901760
    %1764 = vmatmul.mubr.f32.gmra.mrb[0].mxu0 %v1763
    %v1765 = vpop.f32.mrb[0].mxu0
    %v1766 = vadd.f32 %v1645, %v1765
    %v1767 = vpop.f32.mrb[0].mxu0
    %1768 = vmatprep.mubr.f32.mxu0 0.0
    %v1769 = vand.u32 %v941, 4294901760
    %1770 = vmatmul.mubr.f32.gmra.mrb[0].mxu0 %v1769
    %v1771 = vpop.f32.mrb[0].mxu0
    %v1772 = vadd.f32 %v1651, %v1771
    %v1773 = vpop.f32.mrb[0].mxu0
    %1774 = vmatprep.mubr.f32.mxu0 0.0
    %v1775 = vand.u32 %v944, 4294901760
    %1776 = vmatmul.mubr.f32.gmra.mrb[0].mxu0 %v1775
    %v1777 = vpop.f32.mrb[0].mxu0
    %v1778 = vadd.f32 %v1657, %v1777
    %v1779 = vpop.f32.mrb[0].mxu0
    %1780 = vmatprep.mubr.f32.mxu0 0.0
    %v1781 = vand.u32 %v947, 4294901760
    %1782 = vmatmul.mubr.f32.gmra.mrb[0].mxu0 %v1781
    %v1783 = vpop.f32.mrb[0].mxu0
    %v1784 = vadd.f32 %v1663, %v1783
    %v1785 = vpop.f32.mrb[0].mxu0
    %1786 = vdwg.mxu0
    %v1787 = vmax.f32 %v1742, 0.0
    %v1788 = vmax.f32 %v1748, 0.0
    %v1789 = vmax.f32 %v1754, 0.0
    %v1790 = vmax.f32 %v1760, 0.0
    %v1791 = vmax.f32 %v1766, 0.0
    %v1792 = vmax.f32 %v1772, 0.0
    %v1793 = vmax.f32 %v1778, 0.0
    %v1794 = vmax.f32 %v1784, 0.0
    %v1795 = vld [vmem:[%s5] sm:$0xff]
    %v1796 = vld [vmem:[%s5 + $0x8] sm:$0xff]
    %v1797 = vld [vmem:[%s5 + $0x10] sm:$0xff]
    %v1798 = vld [vmem:[%s5 + $0x18] sm:$0xff]
    %v1799 = vld [vmem:[%s5 + $0x20] sm:$0xff]
    %v1800 = vld [vmem:[%s5 + $0x28] sm:$0xff]
    %v1801 = vld [vmem:[%s5 + $0x30] sm:$0xff]
    %v1802 = vld [vmem:[%s5 + $0x38] sm:$0xff]
    %1804 = vset.pattern.permute.xlu0 0
    %1805 = vperm.xlu0 %1804, %v1795
    %v1806 = vpop.permute.xlu0 %1805
    %1809 = vset.pattern.permute.xlu0 0
    %1810 = vperm.xlu0 %1809, %v1796
    %v1811 = vpop.permute.xlu0 %1810
    %1814 = vset.pattern.permute.xlu0 0
    %1815 = vperm.xlu0 %1814, %v1797
    %v1816 = vpop.permute.xlu0 %1815
    %1819 = vset.pattern.permute.xlu0 0
    %1820 = vperm.xlu0 %1819, %v1798
    %v1821 = vpop.permute.xlu0 %1820
    %1824 = vset.pattern.permute.xlu0 0
    %1825 = vperm.xlu0 %1824, %v1799
    %v1826 = vpop.permute.xlu0 %1825
    %1829 = vset.pattern.permute.xlu0 0
    %1830 = vperm.xlu0 %1829, %v1800
    %v1831 = vpop.permute.xlu0 %1830
    %1834 = vset.pattern.permute.xlu0 0
    %1835 = vperm.xlu0 %1834, %v1801
    %v1836 = vpop.permute.xlu0 %1835
    %1839 = vset.pattern.permute.xlu0 0
    %1840 = vperm.xlu0 %1839, %v1802
    %v1841 = vpop.permute.xlu0 %1840
    %v1843 = vmul.f32 %v1787, %v1806
    %v1844 = vmul.f32 %v1788, %v1811
    %v1845 = vmul.f32 %v1789, %v1816
    %v1846 = vmul.f32 %v1790, %v1821
    %v1847 = vmul.f32 %v1791, %v1826
    %v1848 = vmul.f32 %v1792, %v1831
    %v1849 = vmul.f32 %v1793, %v1836
    %v1850 = vmul.f32 %v1794, %v1841
    %vm1851 = vcmask 64512
    %v1852 = vsel %vm1851, %v1843, 0.0
    %v1853 = vsel %vm1851, %v1844, 0.0
    %v1854 = vadd.f32 %v1852, %v1853
    %v1855 = vsel %vm1851, %v1845, 0.0
    %v1856 = vadd.f32 %v1854, %v1855
    %v1857 = vsel %vm1851, %v1846, 0.0
    %v1858 = vadd.f32 %v1856, %v1857
    %v1859 = vsel %vm1851, %v1847, 0.0
    %v1860 = vadd.f32 %v1858, %v1859
    %v1861 = vsel %vm1851, %v1848, 0.0
    %v1862 = vadd.f32 %v1860, %v1861
    %v1863 = vsel %vm1851, %v1849, 0.0
    %v1864 = vadd.f32 %v1862, %v1863
    %v1865 = vsel %vm1851, %v1850, 0.0
    %v1866 = vadd.f32 %v1864, %v1865
    %v1867 = vrot.slane %v1866, 4
    %v1868 = vadd.f32 %v1866, %v1867
    %v1869 = vrot.slane %v1868, 2
    %v1870 = vadd.f32 %v1868, %v1869
    %v1871 = vrot.slane %v1870, 1
    %v1872 = vadd.f32 %v1870, %v1871
    %s1873 = sld [smem:[#allocation2]]
    %v1874 = vstv %s1873
    %v1875 = vadd.f32 %v1872, %v1874
    %vm1876 = vcmask 57344
    %1877 = vst.msk [vmem:[#allocation3] sm:$0x1] %vm1876, %v1875
    // Predicated region
    $region30: #{critic_forward.1} parent=1 // pred_check
      _
    $region31: #{critic_forward.1} parent=1 // pred_check_branch
      %1879 = sbr.rel (0) target = $region33
    $region32: #{critic_forward.1} parent=1 // pred_region
      %s1881 = ssub.s32 16, 16
      %1882 = vsyncadd [#allocation4], %s1881
      %s1884 = sshll.u32 [#allocation3], 4
      %s1885 = int_to_ptr.vmem [resolvable:$true] %s1884
      %1887 = dma.vmem_to_hbm [thread:$0]  %s1885, 16, %s7, [#allocation4]
    $region33: #{critic_forward.1} parent=1 // pred_fallthru
      _
    // Predicated region
    $region34: #{critic_forward.1} parent=1 // pred_check
      _
    $region35: #{critic_forward.1} parent=1 // pred_check_branch
      %1889 = sbr.rel (0) target = $region37
    $region36: #{critic_forward.1} parent=1 // pred_region
      %1890 = dma.done [#allocation4], 16
    $region37: #{critic_forward.1} parent=1 // pred_fallthru
      _
    %1891 = vsyncpa [#allocation4], 1

</llo_original>
